<compile_context>
chip_gen: v5e
topology: v5e:2x2
jax: 0.10.0
libtpu: 0.0.40
codegen_flags: <defaults>
</compile_context>

<pallas_src>
import functools
import math

import jax
import jax.numpy as jnp
from jax import lax
from jax.experimental import pallas as pl
from jax.experimental.pallas import tpu as pltpu

KSIZE = 7
PAD = KSIZE // 2


def spatial_attention_kernel(w_ref, m_ref, x_ref, o_ref, *, width):
    # w_ref : SMEM (2*7*7,)     flattened conv weight, layout [ci, ki, kj]
    # m_ref : VMEM (14, H*W)    rows 0..6  = column-validity masks per kj
    #                           rows 7..13 = row-validity masks per ki
    # x_ref : VMEM (TB, C, H*W) input block
    # o_ref : VMEM (TB, C, H*W) output block
    x = x_ref[...].astype(jnp.float32)            # single load of the tile
    tb, c, hw = x.shape

    # Fused channel-wise max / mean pooling (one pass over the loaded tile).
    max_pool = jnp.max(x, axis=1)                 # (TB, HW)
    avg_pool = jnp.sum(x, axis=1) * (1.0 / c)     # (TB, HW)

    # 7x7 "same" convolution on the flat (H*W) lane layout.
    # Column (kj / lane) shifts are hoisted: 7 rolls per pooled map, shared by
    # all 7 row offsets; zero-padding is a precomputed boundary-mask multiply.
    row_sums = [None] * KSIZE                     # partial sums per row offset ki
    for kj in range(KSIZE):
        dj = kj - PAD
        if dj == 0:
            shm, sha = max_pool, avg_pool
        else:
            cmask = m_ref[kj:kj + 1, :]                        # (1, HW)
            sh = (-dj) % hw
            shm = cmask * pltpu.roll(max_pool, sh, axis=1)
            sha = cmask * pltpu.roll(avg_pool, sh, axis=1)
        for ki in range(KSIZE):
            w_max = w_ref[ki * KSIZE + kj]                     # weight[0, 0, ki, kj]
            w_avg = w_ref[KSIZE * KSIZE + ki * KSIZE + kj]     # weight[0, 1, ki, kj]
            t = w_max * shm + w_avg * sha
            row_sums[ki] = t if row_sums[ki] is None else row_sums[ki] + t

    acc = None
    for ki in range(KSIZE):
        di = ki - PAD
        if di == 0:
            contrib = row_sums[ki]
        else:
            rmask = m_ref[KSIZE + ki:KSIZE + ki + 1, :]        # (1, HW)
            sh = (-(di * width)) % hw
            contrib = rmask * pltpu.roll(row_sums[ki], sh, axis=1)
        acc = contrib if acc is None else acc + contrib

    att = jax.nn.sigmoid(acc)                                  # (TB, HW)
    o_ref[...] = (att[:, None, :] * x).astype(o_ref.dtype)     # lane-dense store


def _conv_boundary_masks(h, w):
    """(14, H*W) f32: rows 0..6 column masks (per kj), rows 7..13 row masks (per ki)."""
    lane = jnp.arange(h * w, dtype=jnp.int32)
    col = lane % w
    row = lane // w
    col_masks = [((col + (kj - PAD) >= 0) & (col + (kj - PAD) < w))
                 for kj in range(KSIZE)]
    row_masks = [((row + (ki - PAD) >= 0) & (row + (ki - PAD) < h))
                 for ki in range(KSIZE)]
    return jnp.stack(col_masks + row_masks).astype(jnp.float32)


def spatial_attention(x, weight, *, block_bytes=1 << 20):
    """x: (B, C, H, W); weight: (1, 2, 7, 7) from Conv2d(2, 1, 7, bias=False)."""
    B, C, H, W = x.shape
    HW = H * W
    x_flat = x.reshape(B, C, HW)                      # free, contiguous reshape
    w_flat = weight.astype(jnp.float32).reshape(-1)   # (2*7*7,)
    masks = _conv_boundary_masks(H, W)                # (14, HW)

    # Pack several batch images per grid step, bounded by a VMEM budget so the
    # double-buffered in/out blocks stay well under scoped VMEM on v5e/v6e/v7x.
    per_img = C * HW * x.dtype.itemsize
    tb = max(1, min(B, block_bytes // max(per_img, 1)))
    while B % tb:
        tb -= 1
    # TODO(synk): for very large C*H*W where even tb == 1 overflows VMEM, add
    # H-halo tiling (block (1, C, TH*W) with a 3-row halo) instead of whole images.

    kernel = functools.partial(spatial_attention_kernel, width=W)
    out_flat = pl.pallas_call(
        kernel,
        out_shape=jax.ShapeDtypeStruct((B, C, HW), x.dtype),
        grid_spec=pltpu.PrefetchScalarGridSpec(
            num_scalar_prefetch=0,
            grid=(B // tb,),
            in_specs=[
                pl.BlockSpec(memory_space=pltpu.MemorySpace.SMEM),   # conv weights
                pl.BlockSpec((2 * KSIZE, HW), lambda b: (0, 0)),     # boundary masks
                pl.BlockSpec((tb, C, HW), lambda b: (b, 0, 0)),      # x
            ],
            out_specs=pl.BlockSpec((tb, C, HW), lambda b: (b, 0, 0)),
        ),
        compiler_params=pltpu.CompilerParams(
            dimension_semantics=("parallel",),
        ),
    )(w_flat, masks, x_flat)
    return out_flat.reshape(B, C, H, W)


def spatial_attention_ref(x, weight):
    """Pure-JAX reference matching the PyTorch forward pass."""
    max_pool = jnp.max(x, axis=1, keepdims=True)
    avg_pool = jnp.mean(x, axis=1, keepdims=True)
    pool = jnp.concatenate([max_pool, avg_pool], axis=1)          # (B, 2, H, W)
    conv = lax.conv_general_dilated(
        pool, weight, window_strides=(1, 1),
        padding=[(PAD, PAD), (PAD, PAD)],
        dimension_numbers=("NCHW", "OIHW", "NCHW"))
    return jax.nn.sigmoid(conv) * x


if __name__ == "__main__":
    key = jax.random.PRNGKey(0)
    kx, kw = jax.random.split(key)

    B, C, H, W = 2, 4, 16, 16
    x = jax.random.normal(kx, (B, C, H, W), dtype=jnp.float32)

    # Deterministic conv weight init (Conv2d(2, 1, 7, bias=False) -> (1, 2, 7, 7)).
    fan_in = 2 * KSIZE * KSIZE
    bound = 1.0 / math.sqrt(fan_in)
    weight = jax.random.uniform(kw, (1, 2, KSIZE, KSIZE),
                                minval=-bound, maxval=bound, dtype=jnp.float32)

    out = jax.block_until_ready(spatial_attention(x, weight))
    ref = jax.block_until_ready(spatial_attention_ref(x, weight))

    assert out.shape == (B, C, H, W)
    assert jnp.allclose(out, ref, atol=1e-5, rtol=1e-5), "mismatch vs reference"

    print("KERNEL_OK")
</pallas_src>

<mosaic_0001>
module attributes {stable_mosaic.version = 11 : i64} {
  func.func @spatial_attention_kernel(%arg0: i32, %arg1: memref<98xf32, #tpu.memory_space<smem>>, %arg2: memref<14x256xf32, #tpu.memory_space<vmem>>, %arg3: memref<2x4x256xf32, #tpu.memory_space<vmem>>, %arg4: memref<2x4x256xf32, #tpu.memory_space<vmem>>) attributes {dimension_semantics = [#tpu.dimension_semantics<parallel>], iteration_bounds = array<i64: 1>, scalar_prefetch = 0 : i64, scratch_operands = 0 : i64, tpu.core_type = #tpu.core_type<tc>, window_params = [{transform_indices = @transform_0, window_bounds = array<i64: 98>}, {pipeline_mode = #tpu.pipeline_mode<synchronous>, transform_indices = @transform_1, window_bounds = array<i64: 14, 256>}, {transform_indices = @transform_2, window_bounds = array<i64: 2, 4, 256>}, {transform_indices = @transform_3, window_bounds = array<i64: 2, 4, 256>}]} {
    %c0 = arith.constant 0 : index
    %c0_0 = arith.constant 0 : index
    %c0_1 = arith.constant 0 : index
    %0 = vector.load %arg3[%c0, %c0_0, %c0_1] : memref<2x4x256xf32, #tpu.memory_space<vmem>>, vector<2x4x256xf32>
    %cst = arith.constant dense<0xFF800000> : vector<2x256xf32>
    %1 = vector.multi_reduction <maximumf>, %0, %cst [1] : vector<2x4x256xf32> to vector<2x256xf32>
    %cst_2 = arith.constant dense<0.000000e+00> : vector<2x256xf32>
    %2 = vector.multi_reduction <add>, %0, %cst_2 [1] : vector<2x4x256xf32> to vector<2x256xf32>
    %cst_3 = arith.constant 2.500000e-01 : f32
    %3 = vector.broadcast %cst_3 : f32 to vector<2x256xf32>
    %4 = arith.mulf %2, %3 : vector<2x256xf32>
    %c0_4 = arith.constant 0 : index
    %c0_5 = arith.constant 0 : index
    %5 = vector.load %arg2[%c0_4, %c0_5] : memref<14x256xf32, #tpu.memory_space<vmem>>, vector<1x256xf32>
    %c3_i32 = arith.constant 3 : i32
    %6 = tpu.dynamic_rotate %1 by %c3_i32 dim 1 : vector<2x256xf32>, i32 -> vector<2x256xf32>
    %7 = vector.broadcast %5 : vector<1x256xf32> to vector<2x256xf32>
    %8 = arith.mulf %7, %6 : vector<2x256xf32>
    %c3_i32_6 = arith.constant 3 : i32
    %9 = tpu.dynamic_rotate %4 by %c3_i32_6 dim 1 : vector<2x256xf32>, i32 -> vector<2x256xf32>
    %10 = vector.broadcast %5 : vector<1x256xf32> to vector<2x256xf32>
    %11 = arith.mulf %10, %9 : vector<2x256xf32>
    %c0_7 = arith.constant 0 : index
    %12 = memref.load %arg1[%c0_7] : memref<98xf32, #tpu.memory_space<smem>>
    %c49 = arith.constant 49 : index
    %13 = memref.load %arg1[%c49] : memref<98xf32, #tpu.memory_space<smem>>
    %14 = vector.broadcast %12 : f32 to vector<2x256xf32>
    %15 = arith.mulf %14, %8 : vector<2x256xf32>
    %16 = vector.broadcast %13 : f32 to vector<2x256xf32>
    %17 = arith.mulf %16, %11 : vector<2x256xf32>
    %18 = arith.addf %15, %17 : vector<2x256xf32>
    %c7 = arith.constant 7 : index
    %19 = memref.load %arg1[%c7] : memref<98xf32, #tpu.memory_space<smem>>
    %c56 = arith.constant 56 : index
    %20 = memref.load %arg1[%c56] : memref<98xf32, #tpu.memory_space<smem>>
    %21 = vector.broadcast %19 : f32 to vector<2x256xf32>
    %22 = arith.mulf %21, %8 : vector<2x256xf32>
    %23 = vector.broadcast %20 : f32 to vector<2x256xf32>
    %24 = arith.mulf %23, %11 : vector<2x256xf32>
    %25 = arith.addf %22, %24 : vector<2x256xf32>
    %c14 = arith.constant 14 : index
    %26 = memref.load %arg1[%c14] : memref<98xf32, #tpu.memory_space<smem>>
    %c63 = arith.constant 63 : index
    %27 = memref.load %arg1[%c63] : memref<98xf32, #tpu.memory_space<smem>>
    %28 = vector.broadcast %26 : f32 to vector<2x256xf32>
    %29 = arith.mulf %28, %8 : vector<2x256xf32>
    %30 = vector.broadcast %27 : f32 to vector<2x256xf32>
    %31 = arith.mulf %30, %11 : vector<2x256xf32>
    %32 = arith.addf %29, %31 : vector<2x256xf32>
    %c21 = arith.constant 21 : index
    %33 = memref.load %arg1[%c21] : memref<98xf32, #tpu.memory_space<smem>>
    %c70 = arith.constant 70 : index
    %34 = memref.load %arg1[%c70] : memref<98xf32, #tpu.memory_space<smem>>
    %35 = vector.broadcast %33 : f32 to vector<2x256xf32>
    %36 = arith.mulf %35, %8 : vector<2x256xf32>
    %37 = vector.broadcast %34 : f32 to vector<2x256xf32>
    %38 = arith.mulf %37, %11 : vector<2x256xf32>
    %39 = arith.addf %36, %38 : vector<2x256xf32>
    %c28 = arith.constant 28 : index
    %40 = memref.load %arg1[%c28] : memref<98xf32, #tpu.memory_space<smem>>
    %c77 = arith.constant 77 : index
    %41 = memref.load %arg1[%c77] : memref<98xf32, #tpu.memory_space<smem>>
    %42 = vector.broadcast %40 : f32 to vector<2x256xf32>
    %43 = arith.mulf %42, %8 : vector<2x256xf32>
    %44 = vector.broadcast %41 : f32 to vector<2x256xf32>
    %45 = arith.mulf %44, %11 : vector<2x256xf32>
    %46 = arith.addf %43, %45 : vector<2x256xf32>
    %c35 = arith.constant 35 : index
    %47 = memref.load %arg1[%c35] : memref<98xf32, #tpu.memory_space<smem>>
    %c84 = arith.constant 84 : index
    %48 = memref.load %arg1[%c84] : memref<98xf32, #tpu.memory_space<smem>>
    %49 = vector.broadcast %47 : f32 to vector<2x256xf32>
    %50 = arith.mulf %49, %8 : vector<2x256xf32>
    %51 = vector.broadcast %48 : f32 to vector<2x256xf32>
    %52 = arith.mulf %51, %11 : vector<2x256xf32>
    %53 = arith.addf %50, %52 : vector<2x256xf32>
    %c42 = arith.constant 42 : index
    %54 = memref.load %arg1[%c42] : memref<98xf32, #tpu.memory_space<smem>>
    %c91 = arith.constant 91 : index
    %55 = memref.load %arg1[%c91] : memref<98xf32, #tpu.memory_space<smem>>
    %56 = vector.broadcast %54 : f32 to vector<2x256xf32>
    %57 = arith.mulf %56, %8 : vector<2x256xf32>
    %58 = vector.broadcast %55 : f32 to vector<2x256xf32>
    %59 = arith.mulf %58, %11 : vector<2x256xf32>
    %60 = arith.addf %57, %59 : vector<2x256xf32>
    %c1 = arith.constant 1 : index
    %c0_8 = arith.constant 0 : index
    %61 = vector.load %arg2[%c1, %c0_8] : memref<14x256xf32, #tpu.memory_space<vmem>>, vector<1x256xf32>
    %c2_i32 = arith.constant 2 : i32
    %62 = tpu.dynamic_rotate %1 by %c2_i32 dim 1 : vector<2x256xf32>, i32 -> vector<2x256xf32>
    %63 = vector.broadcast %61 : vector<1x256xf32> to vector<2x256xf32>
    %64 = arith.mulf %63, %62 : vector<2x256xf32>
    %c2_i32_9 = arith.constant 2 : i32
    %65 = tpu.dynamic_rotate %4 by %c2_i32_9 dim 1 : vector<2x256xf32>, i32 -> vector<2x256xf32>
    %66 = vector.broadcast %61 : vector<1x256xf32> to vector<2x256xf32>
    %67 = arith.mulf %66, %65 : vector<2x256xf32>
    %c1_10 = arith.constant 1 : index
    %68 = memref.load %arg1[%c1_10] : memref<98xf32, #tpu.memory_space<smem>>
    %c50 = arith.constant 50 : index
    %69 = memref.load %arg1[%c50] : memref<98xf32, #tpu.memory_space<smem>>
    %70 = vector.broadcast %68 : f32 to vector<2x256xf32>
    %71 = arith.mulf %70, %64 : vector<2x256xf32>
    %72 = vector.broadcast %69 : f32 to vector<2x256xf32>
    %73 = arith.mulf %72, %67 : vector<2x256xf32>
    %74 = arith.addf %71, %73 : vector<2x256xf32>
    %75 = arith.addf %18, %74 : vector<2x256xf32>
    %c8 = arith.constant 8 : index
    %76 = memref.load %arg1[%c8] : memref<98xf32, #tpu.memory_space<smem>>
    %c57 = arith.constant 57 : index
    %77 = memref.load %arg1[%c57] : memref<98xf32, #tpu.memory_space<smem>>
    %78 = vector.broadcast %76 : f32 to vector<2x256xf32>
    %79 = arith.mulf %78, %64 : vector<2x256xf32>
    %80 = vector.broadcast %77 : f32 to vector<2x256xf32>
    %81 = arith.mulf %80, %67 : vector<2x256xf32>
    %82 = arith.addf %79, %81 : vector<2x256xf32>
    %83 = arith.addf %25, %82 : vector<2x256xf32>
    %c15 = arith.constant 15 : index
    %84 = memref.load %arg1[%c15] : memref<98xf32, #tpu.memory_space<smem>>
    %c64 = arith.constant 64 : index
    %85 = memref.load %arg1[%c64] : memref<98xf32, #tpu.memory_space<smem>>
    %86 = vector.broadcast %84 : f32 to vector<2x256xf32>
    %87 = arith.mulf %86, %64 : vector<2x256xf32>
    %88 = vector.broadcast %85 : f32 to vector<2x256xf32>
    %89 = arith.mulf %88, %67 : vector<2x256xf32>
    %90 = arith.addf %87, %89 : vector<2x256xf32>
    %91 = arith.addf %32, %90 : vector<2x256xf32>
    %c22 = arith.constant 22 : index
    %92 = memref.load %arg1[%c22] : memref<98xf32, #tpu.memory_space<smem>>
    %c71 = arith.constant 71 : index
    %93 = memref.load %arg1[%c71] : memref<98xf32, #tpu.memory_space<smem>>
    %94 = vector.broadcast %92 : f32 to vector<2x256xf32>
    %95 = arith.mulf %94, %64 : vector<2x256xf32>
    %96 = vector.broadcast %93 : f32 to vector<2x256xf32>
    %97 = arith.mulf %96, %67 : vector<2x256xf32>
    %98 = arith.addf %95, %97 : vector<2x256xf32>
    %99 = arith.addf %39, %98 : vector<2x256xf32>
    %c29 = arith.constant 29 : index
    %100 = memref.load %arg1[%c29] : memref<98xf32, #tpu.memory_space<smem>>
    %c78 = arith.constant 78 : index
    %101 = memref.load %arg1[%c78] : memref<98xf32, #tpu.memory_space<smem>>
    %102 = vector.broadcast %100 : f32 to vector<2x256xf32>
    %103 = arith.mulf %102, %64 : vector<2x256xf32>
    %104 = vector.broadcast %101 : f32 to vector<2x256xf32>
    %105 = arith.mulf %104, %67 : vector<2x256xf32>
    %106 = arith.addf %103, %105 : vector<2x256xf32>
    %107 = arith.addf %46, %106 : vector<2x256xf32>
    %c36 = arith.constant 36 : index
    %108 = memref.load %arg1[%c36] : memref<98xf32, #tpu.memory_space<smem>>
    %c85 = arith.constant 85 : index
    %109 = memref.load %arg1[%c85] : memref<98xf32, #tpu.memory_space<smem>>
    %110 = vector.broadcast %108 : f32 to vector<2x256xf32>
    %111 = arith.mulf %110, %64 : vector<2x256xf32>
    %112 = vector.broadcast %109 : f32 to vector<2x256xf32>
    %113 = arith.mulf %112, %67 : vector<2x256xf32>
    %114 = arith.addf %111, %113 : vector<2x256xf32>
    %115 = arith.addf %53, %114 : vector<2x256xf32>
    %c43 = arith.constant 43 : index
    %116 = memref.load %arg1[%c43] : memref<98xf32, #tpu.memory_space<smem>>
    %c92 = arith.constant 92 : index
    %117 = memref.load %arg1[%c92] : memref<98xf32, #tpu.memory_space<smem>>
    %118 = vector.broadcast %116 : f32 to vector<2x256xf32>
    %119 = arith.mulf %118, %64 : vector<2x256xf32>
    %120 = vector.broadcast %117 : f32 to vector<2x256xf32>
    %121 = arith.mulf %120, %67 : vector<2x256xf32>
    %122 = arith.addf %119, %121 : vector<2x256xf32>
    %123 = arith.addf %60, %122 : vector<2x256xf32>
    %c2 = arith.constant 2 : index
    %c0_11 = arith.constant 0 : index
    %124 = vector.load %arg2[%c2, %c0_11] : memref<14x256xf32, #tpu.memory_space<vmem>>, vector<1x256xf32>
    %c1_i32 = arith.constant 1 : i32
    %125 = tpu.dynamic_rotate %1 by %c1_i32 dim 1 : vector<2x256xf32>, i32 -> vector<2x256xf32>
    %126 = vector.broadcast %124 : vector<1x256xf32> to vector<2x256xf32>
    %127 = arith.mulf %126, %125 : vector<2x256xf32>
    %c1_i32_12 = arith.constant 1 : i32
    %128 = tpu.dynamic_rotate %4 by %c1_i32_12 dim 1 : vector<2x256xf32>, i32 -> vector<2x256xf32>
    %129 = vector.broadcast %124 : vector<1x256xf32> to vector<2x256xf32>
    %130 = arith.mulf %129, %128 : vector<2x256xf32>
    %c2_13 = arith.constant 2 : index
    %131 = memref.load %arg1[%c2_13] : memref<98xf32, #tpu.memory_space<smem>>
    %c51 = arith.constant 51 : index
    %132 = memref.load %arg1[%c51] : memref<98xf32, #tpu.memory_space<smem>>
    %133 = vector.broadcast %131 : f32 to vector<2x256xf32>
    %134 = arith.mulf %133, %127 : vector<2x256xf32>
    %135 = vector.broadcast %132 : f32 to vector<2x256xf32>
    %136 = arith.mulf %135, %130 : vector<2x256xf32>
    %137 = arith.addf %134, %136 : vector<2x256xf32>
    %138 = arith.addf %75, %137 : vector<2x256xf32>
    %c9 = arith.constant 9 : index
    %139 = memref.load %arg1[%c9] : memref<98xf32, #tpu.memory_space<smem>>
    %c58 = arith.constant 58 : index
    %140 = memref.load %arg1[%c58] : memref<98xf32, #tpu.memory_space<smem>>
    %141 = vector.broadcast %139 : f32 to vector<2x256xf32>
    %142 = arith.mulf %141, %127 : vector<2x256xf32>
    %143 = vector.broadcast %140 : f32 to vector<2x256xf32>
    %144 = arith.mulf %143, %130 : vector<2x256xf32>
    %145 = arith.addf %142, %144 : vector<2x256xf32>
    %146 = arith.addf %83, %145 : vector<2x256xf32>
    %c16 = arith.constant 16 : index
    %147 = memref.load %arg1[%c16] : memref<98xf32, #tpu.memory_space<smem>>
    %c65 = arith.constant 65 : index
    %148 = memref.load %arg1[%c65] : memref<98xf32, #tpu.memory_space<smem>>
    %149 = vector.broadcast %147 : f32 to vector<2x256xf32>
    %150 = arith.mulf %149, %127 : vector<2x256xf32>
    %151 = vector.broadcast %148 : f32 to vector<2x256xf32>
    %152 = arith.mulf %151, %130 : vector<2x256xf32>
    %153 = arith.addf %150, %152 : vector<2x256xf32>
    %154 = arith.addf %91, %153 : vector<2x256xf32>
    %c23 = arith.constant 23 : index
    %155 = memref.load %arg1[%c23] : memref<98xf32, #tpu.memory_space<smem>>
    %c72 = arith.constant 72 : index
    %156 = memref.load %arg1[%c72] : memref<98xf32, #tpu.memory_space<smem>>
    %157 = vector.broadcast %155 : f32 to vector<2x256xf32>
    %158 = arith.mulf %157, %127 : vector<2x256xf32>
    %159 = vector.broadcast %156 : f32 to vector<2x256xf32>
    %160 = arith.mulf %159, %130 : vector<2x256xf32>
    %161 = arith.addf %158, %160 : vector<2x256xf32>
    %162 = arith.addf %99, %161 : vector<2x256xf32>
    %c30 = arith.constant 30 : index
    %163 = memref.load %arg1[%c30] : memref<98xf32, #tpu.memory_space<smem>>
    %c79 = arith.constant 79 : index
    %164 = memref.load %arg1[%c79] : memref<98xf32, #tpu.memory_space<smem>>
    %165 = vector.broadcast %163 : f32 to vector<2x256xf32>
    %166 = arith.mulf %165, %127 : vector<2x256xf32>
    %167 = vector.broadcast %164 : f32 to vector<2x256xf32>
    %168 = arith.mulf %167, %130 : vector<2x256xf32>
    %169 = arith.addf %166, %168 : vector<2x256xf32>
    %170 = arith.addf %107, %169 : vector<2x256xf32>
    %c37 = arith.constant 37 : index
    %171 = memref.load %arg1[%c37] : memref<98xf32, #tpu.memory_space<smem>>
    %c86 = arith.constant 86 : index
    %172 = memref.load %arg1[%c86] : memref<98xf32, #tpu.memory_space<smem>>
    %173 = vector.broadcast %171 : f32 to vector<2x256xf32>
    %174 = arith.mulf %173, %127 : vector<2x256xf32>
    %175 = vector.broadcast %172 : f32 to vector<2x256xf32>
    %176 = arith.mulf %175, %130 : vector<2x256xf32>
    %177 = arith.addf %174, %176 : vector<2x256xf32>
    %178 = arith.addf %115, %177 : vector<2x256xf32>
    %c44 = arith.constant 44 : index
    %179 = memref.load %arg1[%c44] : memref<98xf32, #tpu.memory_space<smem>>
    %c93 = arith.constant 93 : index
    %180 = memref.load %arg1[%c93] : memref<98xf32, #tpu.memory_space<smem>>
    %181 = vector.broadcast %179 : f32 to vector<2x256xf32>
    %182 = arith.mulf %181, %127 : vector<2x256xf32>
    %183 = vector.broadcast %180 : f32 to vector<2x256xf32>
    %184 = arith.mulf %183, %130 : vector<2x256xf32>
    %185 = arith.addf %182, %184 : vector<2x256xf32>
    %186 = arith.addf %123, %185 : vector<2x256xf32>
    %c3 = arith.constant 3 : index
    %187 = memref.load %arg1[%c3] : memref<98xf32, #tpu.memory_space<smem>>
    %c52 = arith.constant 52 : index
    %188 = memref.load %arg1[%c52] : memref<98xf32, #tpu.memory_space<smem>>
    %189 = vector.broadcast %187 : f32 to vector<2x256xf32>
    %190 = arith.mulf %189, %1 : vector<2x256xf32>
    %191 = vector.broadcast %188 : f32 to vector<2x256xf32>
    %192 = arith.mulf %191, %4 : vector<2x256xf32>
    %193 = arith.addf %190, %192 : vector<2x256xf32>
    %194 = arith.addf %138, %193 : vector<2x256xf32>
    %c10 = arith.constant 10 : index
    %195 = memref.load %arg1[%c10] : memref<98xf32, #tpu.memory_space<smem>>
    %c59 = arith.constant 59 : index
    %196 = memref.load %arg1[%c59] : memref<98xf32, #tpu.memory_space<smem>>
    %197 = vector.broadcast %195 : f32 to vector<2x256xf32>
    %198 = arith.mulf %197, %1 : vector<2x256xf32>
    %199 = vector.broadcast %196 : f32 to vector<2x256xf32>
    %200 = arith.mulf %199, %4 : vector<2x256xf32>
    %201 = arith.addf %198, %200 : vector<2x256xf32>
    %202 = arith.addf %146, %201 : vector<2x256xf32>
    %c17 = arith.constant 17 : index
    %203 = memref.load %arg1[%c17] : memref<98xf32, #tpu.memory_space<smem>>
    %c66 = arith.constant 66 : index
    %204 = memref.load %arg1[%c66] : memref<98xf32, #tpu.memory_space<smem>>
    %205 = vector.broadcast %203 : f32 to vector<2x256xf32>
    %206 = arith.mulf %205, %1 : vector<2x256xf32>
    %207 = vector.broadcast %204 : f32 to vector<2x256xf32>
    %208 = arith.mulf %207, %4 : vector<2x256xf32>
    %209 = arith.addf %206, %208 : vector<2x256xf32>
    %210 = arith.addf %154, %209 : vector<2x256xf32>
    %c24 = arith.constant 24 : index
    %211 = memref.load %arg1[%c24] : memref<98xf32, #tpu.memory_space<smem>>
    %c73 = arith.constant 73 : index
    %212 = memref.load %arg1[%c73] : memref<98xf32, #tpu.memory_space<smem>>
    %213 = vector.broadcast %211 : f32 to vector<2x256xf32>
    %214 = arith.mulf %213, %1 : vector<2x256xf32>
    %215 = vector.broadcast %212 : f32 to vector<2x256xf32>
    %216 = arith.mulf %215, %4 : vector<2x256xf32>
    %217 = arith.addf %214, %216 : vector<2x256xf32>
    %218 = arith.addf %162, %217 : vector<2x256xf32>
    %c31 = arith.constant 31 : index
    %219 = memref.load %arg1[%c31] : memref<98xf32, #tpu.memory_space<smem>>
    %c80 = arith.constant 80 : index
    %220 = memref.load %arg1[%c80] : memref<98xf32, #tpu.memory_space<smem>>
    %221 = vector.broadcast %219 : f32 to vector<2x256xf32>
    %222 = arith.mulf %221, %1 : vector<2x256xf32>
    %223 = vector.broadcast %220 : f32 to vector<2x256xf32>
    %224 = arith.mulf %223, %4 : vector<2x256xf32>
    %225 = arith.addf %222, %224 : vector<2x256xf32>
    %226 = arith.addf %170, %225 : vector<2x256xf32>
    %c38 = arith.constant 38 : index
    %227 = memref.load %arg1[%c38] : memref<98xf32, #tpu.memory_space<smem>>
    %c87 = arith.constant 87 : index
    %228 = memref.load %arg1[%c87] : memref<98xf32, #tpu.memory_space<smem>>
    %229 = vector.broadcast %227 : f32 to vector<2x256xf32>
    %230 = arith.mulf %229, %1 : vector<2x256xf32>
    %231 = vector.broadcast %228 : f32 to vector<2x256xf32>
    %232 = arith.mulf %231, %4 : vector<2x256xf32>
    %233 = arith.addf %230, %232 : vector<2x256xf32>
    %234 = arith.addf %178, %233 : vector<2x256xf32>
    %c45 = arith.constant 45 : index
    %235 = memref.load %arg1[%c45] : memref<98xf32, #tpu.memory_space<smem>>
    %c94 = arith.constant 94 : index
    %236 = memref.load %arg1[%c94] : memref<98xf32, #tpu.memory_space<smem>>
    %237 = vector.broadcast %235 : f32 to vector<2x256xf32>
    %238 = arith.mulf %237, %1 : vector<2x256xf32>
    %239 = vector.broadcast %236 : f32 to vector<2x256xf32>
    %240 = arith.mulf %239, %4 : vector<2x256xf32>
    %241 = arith.addf %238, %240 : vector<2x256xf32>
    %242 = arith.addf %186, %241 : vector<2x256xf32>
    %c4 = arith.constant 4 : index
    %c0_14 = arith.constant 0 : index
    %243 = vector.load %arg2[%c4, %c0_14] : memref<14x256xf32, #tpu.memory_space<vmem>>, vector<1x256xf32>
    %c255_i32 = arith.constant 255 : i32
    %244 = tpu.dynamic_rotate %1 by %c255_i32 dim 1 : vector<2x256xf32>, i32 -> vector<2x256xf32>
    %245 = vector.broadcast %243 : vector<1x256xf32> to vector<2x256xf32>
    %246 = arith.mulf %245, %244 : vector<2x256xf32>
    %c255_i32_15 = arith.constant 255 : i32
    %247 = tpu.dynamic_rotate %4 by %c255_i32_15 dim 1 : vector<2x256xf32>, i32 -> vector<2x256xf32>
    %248 = vector.broadcast %243 : vector<1x256xf32> to vector<2x256xf32>
    %249 = arith.mulf %248, %247 : vector<2x256xf32>
    %c4_16 = arith.constant 4 : index
    %250 = memref.load %arg1[%c4_16] : memref<98xf32, #tpu.memory_space<smem>>
    %c53 = arith.constant 53 : index
    %251 = memref.load %arg1[%c53] : memref<98xf32, #tpu.memory_space<smem>>
    %252 = vector.broadcast %250 : f32 to vector<2x256xf32>
    %253 = arith.mulf %252, %246 : vector<2x256xf32>
    %254 = vector.broadcast %251 : f32 to vector<2x256xf32>
    %255 = arith.mulf %254, %249 : vector<2x256xf32>
    %256 = arith.addf %253, %255 : vector<2x256xf32>
    %257 = arith.addf %194, %256 : vector<2x256xf32>
    %c11 = arith.constant 11 : index
    %258 = memref.load %arg1[%c11] : memref<98xf32, #tpu.memory_space<smem>>
    %c60 = arith.constant 60 : index
    %259 = memref.load %arg1[%c60] : memref<98xf32, #tpu.memory_space<smem>>
    %260 = vector.broadcast %258 : f32 to vector<2x256xf32>
    %261 = arith.mulf %260, %246 : vector<2x256xf32>
    %262 = vector.broadcast %259 : f32 to vector<2x256xf32>
    %263 = arith.mulf %262, %249 : vector<2x256xf32>
    %264 = arith.addf %261, %263 : vector<2x256xf32>
    %265 = arith.addf %202, %264 : vector<2x256xf32>
    %c18 = arith.constant 18 : index
    %266 = memref.load %arg1[%c18] : memref<98xf32, #tpu.memory_space<smem>>
    %c67 = arith.constant 67 : index
    %267 = memref.load %arg1[%c67] : memref<98xf32, #tpu.memory_space<smem>>
    %268 = vector.broadcast %266 : f32 to vector<2x256xf32>
    %269 = arith.mulf %268, %246 : vector<2x256xf32>
    %270 = vector.broadcast %267 : f32 to vector<2x256xf32>
    %271 = arith.mulf %270, %249 : vector<2x256xf32>
    %272 = arith.addf %269, %271 : vector<2x256xf32>
    %273 = arith.addf %210, %272 : vector<2x256xf32>
    %c25 = arith.constant 25 : index
    %274 = memref.load %arg1[%c25] : memref<98xf32, #tpu.memory_space<smem>>
    %c74 = arith.constant 74 : index
    %275 = memref.load %arg1[%c74] : memref<98xf32, #tpu.memory_space<smem>>
    %276 = vector.broadcast %274 : f32 to vector<2x256xf32>
    %277 = arith.mulf %276, %246 : vector<2x256xf32>
    %278 = vector.broadcast %275 : f32 to vector<2x256xf32>
    %279 = arith.mulf %278, %249 : vector<2x256xf32>
    %280 = arith.addf %277, %279 : vector<2x256xf32>
    %281 = arith.addf %218, %280 : vector<2x256xf32>
    %c32 = arith.constant 32 : index
    %282 = memref.load %arg1[%c32] : memref<98xf32, #tpu.memory_space<smem>>
    %c81 = arith.constant 81 : index
    %283 = memref.load %arg1[%c81] : memref<98xf32, #tpu.memory_space<smem>>
    %284 = vector.broadcast %282 : f32 to vector<2x256xf32>
    %285 = arith.mulf %284, %246 : vector<2x256xf32>
    %286 = vector.broadcast %283 : f32 to vector<2x256xf32>
    %287 = arith.mulf %286, %249 : vector<2x256xf32>
    %288 = arith.addf %285, %287 : vector<2x256xf32>
    %289 = arith.addf %226, %288 : vector<2x256xf32>
    %c39 = arith.constant 39 : index
    %290 = memref.load %arg1[%c39] : memref<98xf32, #tpu.memory_space<smem>>
    %c88 = arith.constant 88 : index
    %291 = memref.load %arg1[%c88] : memref<98xf32, #tpu.memory_space<smem>>
    %292 = vector.broadcast %290 : f32 to vector<2x256xf32>
    %293 = arith.mulf %292, %246 : vector<2x256xf32>
    %294 = vector.broadcast %291 : f32 to vector<2x256xf32>
    %295 = arith.mulf %294, %249 : vector<2x256xf32>
    %296 = arith.addf %293, %295 : vector<2x256xf32>
    %297 = arith.addf %234, %296 : vector<2x256xf32>
    %c46 = arith.constant 46 : index
    %298 = memref.load %arg1[%c46] : memref<98xf32, #tpu.memory_space<smem>>
    %c95 = arith.constant 95 : index
    %299 = memref.load %arg1[%c95] : memref<98xf32, #tpu.memory_space<smem>>
    %300 = vector.broadcast %298 : f32 to vector<2x256xf32>
    %301 = arith.mulf %300, %246 : vector<2x256xf32>
    %302 = vector.broadcast %299 : f32 to vector<2x256xf32>
    %303 = arith.mulf %302, %249 : vector<2x256xf32>
    %304 = arith.addf %301, %303 : vector<2x256xf32>
    %305 = arith.addf %242, %304 : vector<2x256xf32>
    %c5 = arith.constant 5 : index
    %c0_17 = arith.constant 0 : index
    %306 = vector.load %arg2[%c5, %c0_17] : memref<14x256xf32, #tpu.memory_space<vmem>>, vector<1x256xf32>
    %c254_i32 = arith.constant 254 : i32
    %307 = tpu.dynamic_rotate %1 by %c254_i32 dim 1 : vector<2x256xf32>, i32 -> vector<2x256xf32>
    %308 = vector.broadcast %306 : vector<1x256xf32> to vector<2x256xf32>
    %309 = arith.mulf %308, %307 : vector<2x256xf32>
    %c254_i32_18 = arith.constant 254 : i32
    %310 = tpu.dynamic_rotate %4 by %c254_i32_18 dim 1 : vector<2x256xf32>, i32 -> vector<2x256xf32>
    %311 = vector.broadcast %306 : vector<1x256xf32> to vector<2x256xf32>
    %312 = arith.mulf %311, %310 : vector<2x256xf32>
    %c5_19 = arith.constant 5 : index
    %313 = memref.load %arg1[%c5_19] : memref<98xf32, #tpu.memory_space<smem>>
    %c54 = arith.constant 54 : index
    %314 = memref.load %arg1[%c54] : memref<98xf32, #tpu.memory_space<smem>>
    %315 = vector.broadcast %313 : f32 to vector<2x256xf32>
    %316 = arith.mulf %315, %309 : vector<2x256xf32>
    %317 = vector.broadcast %314 : f32 to vector<2x256xf32>
    %318 = arith.mulf %317, %312 : vector<2x256xf32>
    %319 = arith.addf %316, %318 : vector<2x256xf32>
    %320 = arith.addf %257, %319 : vector<2x256xf32>
    %c12 = arith.constant 12 : index
    %321 = memref.load %arg1[%c12] : memref<98xf32, #tpu.memory_space<smem>>
    %c61 = arith.constant 61 : index
    %322 = memref.load %arg1[%c61] : memref<98xf32, #tpu.memory_space<smem>>
    %323 = vector.broadcast %321 : f32 to vector<2x256xf32>
    %324 = arith.mulf %323, %309 : vector<2x256xf32>
    %325 = vector.broadcast %322 : f32 to vector<2x256xf32>
    %326 = arith.mulf %325, %312 : vector<2x256xf32>
    %327 = arith.addf %324, %326 : vector<2x256xf32>
    %328 = arith.addf %265, %327 : vector<2x256xf32>
    %c19 = arith.constant 19 : index
    %329 = memref.load %arg1[%c19] : memref<98xf32, #tpu.memory_space<smem>>
    %c68 = arith.constant 68 : index
    %330 = memref.load %arg1[%c68] : memref<98xf32, #tpu.memory_space<smem>>
    %331 = vector.broadcast %329 : f32 to vector<2x256xf32>
    %332 = arith.mulf %331, %309 : vector<2x256xf32>
    %333 = vector.broadcast %330 : f32 to vector<2x256xf32>
    %334 = arith.mulf %333, %312 : vector<2x256xf32>
    %335 = arith.addf %332, %334 : vector<2x256xf32>
    %336 = arith.addf %273, %335 : vector<2x256xf32>
    %c26 = arith.constant 26 : index
    %337 = memref.load %arg1[%c26] : memref<98xf32, #tpu.memory_space<smem>>
    %c75 = arith.constant 75 : index
    %338 = memref.load %arg1[%c75] : memref<98xf32, #tpu.memory_space<smem>>
    %339 = vector.broadcast %337 : f32 to vector<2x256xf32>
    %340 = arith.mulf %339, %309 : vector<2x256xf32>
    %341 = vector.broadcast %338 : f32 to vector<2x256xf32>
    %342 = arith.mulf %341, %312 : vector<2x256xf32>
    %343 = arith.addf %340, %342 : vector<2x256xf32>
    %344 = arith.addf %281, %343 : vector<2x256xf32>
    %c33 = arith.constant 33 : index
    %345 = memref.load %arg1[%c33] : memref<98xf32, #tpu.memory_space<smem>>
    %c82 = arith.constant 82 : index
    %346 = memref.load %arg1[%c82] : memref<98xf32, #tpu.memory_space<smem>>
    %347 = vector.broadcast %345 : f32 to vector<2x256xf32>
    %348 = arith.mulf %347, %309 : vector<2x256xf32>
    %349 = vector.broadcast %346 : f32 to vector<2x256xf32>
    %350 = arith.mulf %349, %312 : vector<2x256xf32>
    %351 = arith.addf %348, %350 : vector<2x256xf32>
    %352 = arith.addf %289, %351 : vector<2x256xf32>
    %c40 = arith.constant 40 : index
    %353 = memref.load %arg1[%c40] : memref<98xf32, #tpu.memory_space<smem>>
    %c89 = arith.constant 89 : index
    %354 = memref.load %arg1[%c89] : memref<98xf32, #tpu.memory_space<smem>>
    %355 = vector.broadcast %353 : f32 to vector<2x256xf32>
    %356 = arith.mulf %355, %309 : vector<2x256xf32>
    %357 = vector.broadcast %354 : f32 to vector<2x256xf32>
    %358 = arith.mulf %357, %312 : vector<2x256xf32>
    %359 = arith.addf %356, %358 : vector<2x256xf32>
    %360 = arith.addf %297, %359 : vector<2x256xf32>
    %c47 = arith.constant 47 : index
    %361 = memref.load %arg1[%c47] : memref<98xf32, #tpu.memory_space<smem>>
    %c96 = arith.constant 96 : index
    %362 = memref.load %arg1[%c96] : memref<98xf32, #tpu.memory_space<smem>>
    %363 = vector.broadcast %361 : f32 to vector<2x256xf32>
    %364 = arith.mulf %363, %309 : vector<2x256xf32>
    %365 = vector.broadcast %362 : f32 to vector<2x256xf32>
    %366 = arith.mulf %365, %312 : vector<2x256xf32>
    %367 = arith.addf %364, %366 : vector<2x256xf32>
    %368 = arith.addf %305, %367 : vector<2x256xf32>
    %c6 = arith.constant 6 : index
    %c0_20 = arith.constant 0 : index
    %369 = vector.load %arg2[%c6, %c0_20] : memref<14x256xf32, #tpu.memory_space<vmem>>, vector<1x256xf32>
    %c253_i32 = arith.constant 253 : i32
    %370 = tpu.dynamic_rotate %1 by %c253_i32 dim 1 : vector<2x256xf32>, i32 -> vector<2x256xf32>
    %371 = vector.broadcast %369 : vector<1x256xf32> to vector<2x256xf32>
    %372 = arith.mulf %371, %370 : vector<2x256xf32>
    %c253_i32_21 = arith.constant 253 : i32
    %373 = tpu.dynamic_rotate %4 by %c253_i32_21 dim 1 : vector<2x256xf32>, i32 -> vector<2x256xf32>
    %374 = vector.broadcast %369 : vector<1x256xf32> to vector<2x256xf32>
    %375 = arith.mulf %374, %373 : vector<2x256xf32>
    %c6_22 = arith.constant 6 : index
    %376 = memref.load %arg1[%c6_22] : memref<98xf32, #tpu.memory_space<smem>>
    %c55 = arith.constant 55 : index
    %377 = memref.load %arg1[%c55] : memref<98xf32, #tpu.memory_space<smem>>
    %378 = vector.broadcast %376 : f32 to vector<2x256xf32>
    %379 = arith.mulf %378, %372 : vector<2x256xf32>
    %380 = vector.broadcast %377 : f32 to vector<2x256xf32>
    %381 = arith.mulf %380, %375 : vector<2x256xf32>
    %382 = arith.addf %379, %381 : vector<2x256xf32>
    %383 = arith.addf %320, %382 : vector<2x256xf32>
    %c13 = arith.constant 13 : index
    %384 = memref.load %arg1[%c13] : memref<98xf32, #tpu.memory_space<smem>>
    %c62 = arith.constant 62 : index
    %385 = memref.load %arg1[%c62] : memref<98xf32, #tpu.memory_space<smem>>
    %386 = vector.broadcast %384 : f32 to vector<2x256xf32>
    %387 = arith.mulf %386, %372 : vector<2x256xf32>
    %388 = vector.broadcast %385 : f32 to vector<2x256xf32>
    %389 = arith.mulf %388, %375 : vector<2x256xf32>
    %390 = arith.addf %387, %389 : vector<2x256xf32>
    %391 = arith.addf %328, %390 : vector<2x256xf32>
    %c20 = arith.constant 20 : index
    %392 = memref.load %arg1[%c20] : memref<98xf32, #tpu.memory_space<smem>>
    %c69 = arith.constant 69 : index
    %393 = memref.load %arg1[%c69] : memref<98xf32, #tpu.memory_space<smem>>
    %394 = vector.broadcast %392 : f32 to vector<2x256xf32>
    %395 = arith.mulf %394, %372 : vector<2x256xf32>
    %396 = vector.broadcast %393 : f32 to vector<2x256xf32>
    %397 = arith.mulf %396, %375 : vector<2x256xf32>
    %398 = arith.addf %395, %397 : vector<2x256xf32>
    %399 = arith.addf %336, %398 : vector<2x256xf32>
    %c27 = arith.constant 27 : index
    %400 = memref.load %arg1[%c27] : memref<98xf32, #tpu.memory_space<smem>>
    %c76 = arith.constant 76 : index
    %401 = memref.load %arg1[%c76] : memref<98xf32, #tpu.memory_space<smem>>
    %402 = vector.broadcast %400 : f32 to vector<2x256xf32>
    %403 = arith.mulf %402, %372 : vector<2x256xf32>
    %404 = vector.broadcast %401 : f32 to vector<2x256xf32>
    %405 = arith.mulf %404, %375 : vector<2x256xf32>
    %406 = arith.addf %403, %405 : vector<2x256xf32>
    %407 = arith.addf %344, %406 : vector<2x256xf32>
    %c34 = arith.constant 34 : index
    %408 = memref.load %arg1[%c34] : memref<98xf32, #tpu.memory_space<smem>>
    %c83 = arith.constant 83 : index
    %409 = memref.load %arg1[%c83] : memref<98xf32, #tpu.memory_space<smem>>
    %410 = vector.broadcast %408 : f32 to vector<2x256xf32>
    %411 = arith.mulf %410, %372 : vector<2x256xf32>
    %412 = vector.broadcast %409 : f32 to vector<2x256xf32>
    %413 = arith.mulf %412, %375 : vector<2x256xf32>
    %414 = arith.addf %411, %413 : vector<2x256xf32>
    %415 = arith.addf %352, %414 : vector<2x256xf32>
    %c41 = arith.constant 41 : index
    %416 = memref.load %arg1[%c41] : memref<98xf32, #tpu.memory_space<smem>>
    %c90 = arith.constant 90 : index
    %417 = memref.load %arg1[%c90] : memref<98xf32, #tpu.memory_space<smem>>
    %418 = vector.broadcast %416 : f32 to vector<2x256xf32>
    %419 = arith.mulf %418, %372 : vector<2x256xf32>
    %420 = vector.broadcast %417 : f32 to vector<2x256xf32>
    %421 = arith.mulf %420, %375 : vector<2x256xf32>
    %422 = arith.addf %419, %421 : vector<2x256xf32>
    %423 = arith.addf %360, %422 : vector<2x256xf32>
    %c48 = arith.constant 48 : index
    %424 = memref.load %arg1[%c48] : memref<98xf32, #tpu.memory_space<smem>>
    %c97 = arith.constant 97 : index
    %425 = memref.load %arg1[%c97] : memref<98xf32, #tpu.memory_space<smem>>
    %426 = vector.broadcast %424 : f32 to vector<2x256xf32>
    %427 = arith.mulf %426, %372 : vector<2x256xf32>
    %428 = vector.broadcast %425 : f32 to vector<2x256xf32>
    %429 = arith.mulf %428, %375 : vector<2x256xf32>
    %430 = arith.addf %427, %429 : vector<2x256xf32>
    %431 = arith.addf %368, %430 : vector<2x256xf32>
    %c7_23 = arith.constant 7 : index
    %c0_24 = arith.constant 0 : index
    %432 = vector.load %arg2[%c7_23, %c0_24] : memref<14x256xf32, #tpu.memory_space<vmem>>, vector<1x256xf32>
    %c48_i32 = arith.constant 48 : i32
    %433 = tpu.dynamic_rotate %383 by %c48_i32 dim 1 : vector<2x256xf32>, i32 -> vector<2x256xf32>
    %434 = vector.broadcast %432 : vector<1x256xf32> to vector<2x256xf32>
    %435 = arith.mulf %434, %433 : vector<2x256xf32>
    %c8_25 = arith.constant 8 : index
    %c0_26 = arith.constant 0 : index
    %436 = vector.load %arg2[%c8_25, %c0_26] : memref<14x256xf32, #tpu.memory_space<vmem>>, vector<1x256xf32>
    %c32_i32 = arith.constant 32 : i32
    %437 = tpu.dynamic_rotate %391 by %c32_i32 dim 1 : vector<2x256xf32>, i32 -> vector<2x256xf32>
    %438 = vector.broadcast %436 : vector<1x256xf32> to vector<2x256xf32>
    %439 = arith.mulf %438, %437 : vector<2x256xf32>
    %440 = arith.addf %435, %439 : vector<2x256xf32>
    %c9_27 = arith.constant 9 : index
    %c0_28 = arith.constant 0 : index
    %441 = vector.load %arg2[%c9_27, %c0_28] : memref<14x256xf32, #tpu.memory_space<vmem>>, vector<1x256xf32>
    %c16_i32 = arith.constant 16 : i32
    %442 = tpu.dynamic_rotate %399 by %c16_i32 dim 1 : vector<2x256xf32>, i32 -> vector<2x256xf32>
    %443 = vector.broadcast %441 : vector<1x256xf32> to vector<2x256xf32>
    %444 = arith.mulf %443, %442 : vector<2x256xf32>
    %445 = arith.addf %440, %444 : vector<2x256xf32>
    %446 = arith.addf %445, %407 : vector<2x256xf32>
    %c11_29 = arith.constant 11 : index
    %c0_30 = arith.constant 0 : index
    %447 = vector.load %arg2[%c11_29, %c0_30] : memref<14x256xf32, #tpu.memory_space<vmem>>, vector<1x256xf32>
    %c240_i32 = arith.constant 240 : i32
    %448 = tpu.dynamic_rotate %415 by %c240_i32 dim 1 : vector<2x256xf32>, i32 -> vector<2x256xf32>
    %449 = vector.broadcast %447 : vector<1x256xf32> to vector<2x256xf32>
    %450 = arith.mulf %449, %448 : vector<2x256xf32>
    %451 = arith.addf %446, %450 : vector<2x256xf32>
    %c12_31 = arith.constant 12 : index
    %c0_32 = arith.constant 0 : index
    %452 = vector.load %arg2[%c12_31, %c0_32] : memref<14x256xf32, #tpu.memory_space<vmem>>, vector<1x256xf32>
    %c224_i32 = arith.constant 224 : i32
    %453 = tpu.dynamic_rotate %423 by %c224_i32 dim 1 : vector<2x256xf32>, i32 -> vector<2x256xf32>
    %454 = vector.broadcast %452 : vector<1x256xf32> to vector<2x256xf32>
    %455 = arith.mulf %454, %453 : vector<2x256xf32>
    %456 = arith.addf %451, %455 : vector<2x256xf32>
    %c13_33 = arith.constant 13 : index
    %c0_34 = arith.constant 0 : index
    %457 = vector.load %arg2[%c13_33, %c0_34] : memref<14x256xf32, #tpu.memory_space<vmem>>, vector<1x256xf32>
    %c208_i32 = arith.constant 208 : i32
    %458 = tpu.dynamic_rotate %431 by %c208_i32 dim 1 : vector<2x256xf32>, i32 -> vector<2x256xf32>
    %459 = vector.broadcast %457 : vector<1x256xf32> to vector<2x256xf32>
    %460 = arith.mulf %459, %458 : vector<2x256xf32>
    %461 = arith.addf %456, %460 : vector<2x256xf32>
    %462 = arith.negf %461 : vector<2x256xf32>
    %463 = math.exp %462 : vector<2x256xf32>
    %cst_35 = arith.constant 1.000000e+00 : f32
    %464 = vector.broadcast %cst_35 : f32 to vector<2x256xf32>
    %465 = arith.addf %464, %463 : vector<2x256xf32>
    %466 = arith.divf %464, %465 : vector<2x256xf32>
    %467 = vector.shape_cast %466 : vector<2x256xf32> to vector<2x1x256xf32>
    %468 = vector.broadcast %467 : vector<2x1x256xf32> to vector<2x4x256xf32>
    %469 = arith.mulf %468, %0 : vector<2x4x256xf32>
    %c0_36 = arith.constant 0 : index
    %c0_37 = arith.constant 0 : index
    %c0_38 = arith.constant 0 : index
    %470 = vector.load %arg4[%c0_36, %c0_37, %c0_38] : memref<2x4x256xf32, #tpu.memory_space<vmem>>, vector<2x4x256xf32>
    tpu.vector_store %arg4[%c0_36, %c0_37, %c0_38], %469 {strides = array<i32>} : memref<2x4x256xf32, #tpu.memory_space<vmem>>, vector<2x4x256xf32>,
    return
  }
  func.func @transform_0(%arg0: i32) -> i32 {
    %c0_i32 = arith.constant 0 : i32
    %c0_i32_0 = arith.constant 0 : i32
    return %c0_i32 : i32
  }
  func.func @transform_1(%arg0: i32) -> (i32, i32) {
    %c0_i32 = arith.constant 0 : i32
    %c0_i32_0 = arith.constant 0 : i32
    %c0_i32_1 = arith.constant 0 : i32
    return %c0_i32, %c0_i32_0 : i32, i32
  }
  func.func @transform_2(%arg0: i32) -> (i32, i32, i32) {
    %c0_i32 = arith.constant 0 : i32
    %c0_i32_0 = arith.constant 0 : i32
    %c0_i32_1 = arith.constant 0 : i32
    return %arg0, %c0_i32, %c0_i32_0 : i32, i32, i32
  }
  func.func @transform_3(%arg0: i32) -> (i32, i32, i32) {
    %c0_i32 = arith.constant 0 : i32
    %c0_i32_0 = arith.constant 0 : i32
    %c0_i32_1 = arith.constant 0 : i32
    return %arg0, %c0_i32, %c0_i32_0 : i32, i32, i32
  }
}

</mosaic_0001>

<llo_original>
// kernel: tpu_custom_call.1
$region0: #{tpu_custom_call.1}
  #allocation0 [shape = 'u32[]', space=smem, size = 0x4, offset = 0x4, fixed_abs, tag = 'smem constant byte address 0x4 - core index']
  #allocation1 [shape = 'u32[72,128]{1,0:T(1,128)}', space=vmem, size = 0x9000, scoped, tag = 'internal scratch']
  %s0 = inlined_call_operand.hbm [shape: f32[98], index: 0, kind: input, shape index: {}]
  %s1 = inlined_call_operand.hbm [shape: f32[14,256], index: 1, kind: input, shape index: {}]
  %s2 = inlined_call_operand.hbm [shape: f32[2,4,256], index: 2, kind: input, shape index: {}]
  %s3 = inlined_call_operand.hbm [shape: f32[2,4,256], index: 3, kind: output, shape index: {}]
  %s4 = sld [smem:[#allocation0]]
  $region34: #{tpu_custom_call.1} parent=0
    _
  %s6 = ssub.s32 1, %s4
  %s7 = scalar_select 0, %s6, %s4
  $region1: #{tpu_custom_call.1} parent=0
    #allocation2 [shape = 'u8[512]{0}', space=smem, size = 0x200, scoped, tag = 'input window, operand 0, single buffered']
    #allocation3 [shape = 's32[1]{0}', space=sflag, size = 0x4, scoped, tag = 'scoped memory for tpu_custom_call.1']
    #allocation4 [shape = 's32[1]{0}', space=sflag, size = 0x4, scoped, tag = 'scoped memory for tpu_custom_call.1']
    #allocation5 [shape = 's32[1]{0}', space=sflag, size = 0x4, scoped, tag = 'scoped memory for tpu_custom_call.1']
    #allocation6 [shape = 'u8[16384]{0}', space=vmem, size = 0x4000, scoped, tag = 'input window, operand 1, single buffered']
    #allocation7 [shape = 'u8[8192]{0}', space=vmem, size = 0x2000, scoped, tag = 'input window, operand 2, single buffered']
    #allocation8 [shape = 's32[1]{0}', space=sflag, size = 0x4, scoped, tag = 'scoped memory for tpu_custom_call.1']
    #allocation9 [shape = 'u8[8192]{0}', space=vmem, size = 0x2000, scoped, tag = 'output window, operand 0, single buffered']
    %8 = vsyncpa [#allocation5], 0
    %9 = vsyncpa [#allocation3], 0
    %10 = vsyncpa [#allocation8], 0
    %11 = vsyncpa [#allocation4], 0
    // Predicated region
    $region2: #{tpu_custom_call.1} parent=1 // pred_check
      _
    $region3: #{tpu_custom_call.1} parent=1 // pred_check_branch
      %13 = sbr.rel (0) target = $region5
    $region4: #{tpu_custom_call.1} parent=1 // pred_region
      %15 = vsyncadd [#allocation5], 0
      %s17 = sshll.u32 %s0, 4
      %s18 = int_to_ptr.hbm [resolvable:$true] %s17
      %20 = dma.hbm_to_smem %s18, 16, [#allocation2], [#allocation5]
    $region5: #{tpu_custom_call.1} parent=1 // pred_fallthru
      _
    // Predicated region
    $region6: #{tpu_custom_call.1} parent=1 // pred_check
      _
    $region7: #{tpu_custom_call.1} parent=1 // pred_check_branch
      %22 = sbr.rel (0) target = $region9
    $region8: #{tpu_custom_call.1} parent=1 // pred_region
      %24 = vsyncadd [#allocation3], 0
      %s25 = sshll.u32 %s1, 4
      %s26 = int_to_ptr.hbm [resolvable:$true] %s25
      %s27 = sshll.u32 [#allocation6], 4
      %s28 = int_to_ptr.vmem [resolvable:$true] %s27
      %33 = dma.hbm_to_vmem [thread:$0]  %s26, 512, %s28, [#allocation3], 256, 256, 16
    $region9: #{tpu_custom_call.1} parent=1 // pred_fallthru
      _
    // Predicated region
    $region10: #{tpu_custom_call.1} parent=1 // pred_check
      _
    $region11: #{tpu_custom_call.1} parent=1 // pred_check_branch
      %35 = sbr.rel (0) target = $region13
    $region12: #{tpu_custom_call.1} parent=1 // pred_region
      %37 = vsyncadd [#allocation8], 0
      %s38 = sshll.u32 %s2, 4
      %s39 = int_to_ptr.hbm [resolvable:$true] %s38
      %s40 = sshll.u32 [#allocation7], 4
      %s41 = int_to_ptr.vmem [resolvable:$true] %s40
      %46 = dma.hbm_to_vmem [thread:$0]  %s39, 256, %s41, [#allocation8], 128, 128, 8
    $region13: #{tpu_custom_call.1} parent=1 // pred_fallthru
      _
    // Predicated region
    $region14: #{tpu_custom_call.1} parent=1 // pred_check
      _
    $region15: #{tpu_custom_call.1} parent=1 // pred_check_branch
      %48 = sbr.rel (0) target = $region17
    $region16: #{tpu_custom_call.1} parent=1 // pred_region
      %50 = dma.done [#allocation5], 16
    $region17: #{tpu_custom_call.1} parent=1 // pred_fallthru
      _
    // Predicated region
    $region18: #{tpu_custom_call.1} parent=1 // pred_check
      _
    $region19: #{tpu_custom_call.1} parent=1 // pred_check_branch
      %52 = sbr.rel (0) target = $region21
    $region20: #{tpu_custom_call.1} parent=1 // pred_region
      %54 = dma.done [#allocation3], 512
    $region21: #{tpu_custom_call.1} parent=1 // pred_fallthru
      _
    // Predicated region
    $region22: #{tpu_custom_call.1} parent=1 // pred_check
      _
    $region23: #{tpu_custom_call.1} parent=1 // pred_check_branch
      %56 = sbr.rel (0) target = $region25
    $region24: #{tpu_custom_call.1} parent=1 // pred_region
      %58 = dma.done [#allocation8], 256
    $region25: #{tpu_custom_call.1} parent=1 // pred_fallthru
      _
    %59 = sfence
    %v60 = vld [vmem:[#allocation7] sm:$0xff]
    %v61 = vld [vmem:[#allocation7 + $0x8] sm:$0xff]
    %64 = vst [vmem:[#allocation1] ss:$2 sm:$0xff] %v60
    %v65 = vld.sshfl [vmem:[#allocation1] sm:$0xff pattern:$0x75316420]
    %v66 = vld.sshfl [vmem:[#allocation1 + $0x8] sm:$0xff pattern:$0x75316420]
    %s67 = scalar_lea.vmem [#allocation1], 16
    %68 = vst [vmem:[%s67] ss:$2 sm:$0xff] %v61
    %v69 = vld.sshfl [vmem:[#allocation1 + $0x10] sm:$0xff pattern:$0x75316420]
    %v70 = vld.sshfl [vmem:[#allocation1 + $0x18] sm:$0xff pattern:$0x75316420]
    %vm75 = vcmask 1043456
    %v76 = vsel %vm75, %v65, -inf
    %v77 = vrot.slane %v76, 4
    %v78 = vmax.f32 %v76, %v77
    %v79 = vrot.slane %v78, 2
    %v80 = vmax.f32 %v78, %v79
    %v81 = vrot.slane %v80, 1
    %v82 = vmax.f32 %v80, %v81
    %v83 = vsel %vm75, %v66, -inf
    %v84 = vrot.slane %v83, 4
    %v85 = vmax.f32 %v83, %v84
    %v86 = vrot.slane %v85, 2
    %v87 = vmax.f32 %v85, %v86
    %v88 = vrot.slane %v87, 1
    %v89 = vmax.f32 %v87, %v88
    %v90 = vsel %vm75, %v69, -inf
    %v91 = vrot.slane %v90, 4
    %v92 = vmax.f32 %v90, %v91
    %v93 = vrot.slane %v92, 2
    %v94 = vmax.f32 %v92, %v93
    %v95 = vrot.slane %v94, 1
    %v96 = vmax.f32 %v94, %v95
    %v97 = vsel %vm75, %v70, -inf
    %v98 = vrot.slane %v97, 4
    %v99 = vmax.f32 %v97, %v98
    %v100 = vrot.slane %v99, 2
    %v101 = vmax.f32 %v99, %v100
    %v102 = vrot.slane %v101, 1
    %v103 = vmax.f32 %v101, %v102
    %104 = vst [vmem:[#allocation1] ss:$2 sm:$0xff] %v60
    %v105 = vld.sshfl [vmem:[#allocation1] sm:$0xff pattern:$0x75316420]
    %v106 = vld.sshfl [vmem:[#allocation1 + $0x8] sm:$0xff pattern:$0x75316420]
    %s107 = scalar_lea.vmem [#allocation1], 16
    %108 = vst [vmem:[%s107] ss:$2 sm:$0xff] %v61
    %v109 = vld.sshfl [vmem:[#allocation1 + $0x10] sm:$0xff pattern:$0x75316420]
    %v110 = vld.sshfl [vmem:[#allocation1 + $0x18] sm:$0xff pattern:$0x75316420]
    %v115 = vsel %vm75, %v105, 0.0
    %v116 = vrot.slane %v115, 4
    %v117 = vadd.f32 %v115, %v116
    %v118 = vrot.slane %v117, 2
    %v119 = vadd.f32 %v117, %v118
    %v120 = vrot.slane %v119, 1
    %v121 = vadd.f32 %v119, %v120
    %v122 = vsel %vm75, %v106, 0.0
    %v123 = vrot.slane %v122, 4
    %v124 = vadd.f32 %v122, %v123
    %v125 = vrot.slane %v124, 2
    %v126 = vadd.f32 %v124, %v125
    %v127 = vrot.slane %v126, 1
    %v128 = vadd.f32 %v126, %v127
    %v129 = vsel %vm75, %v109, 0.0
    %v130 = vrot.slane %v129, 4
    %v131 = vadd.f32 %v129, %v130
    %v132 = vrot.slane %v131, 2
    %v133 = vadd.f32 %v131, %v132
    %v134 = vrot.slane %v133, 1
    %v135 = vadd.f32 %v133, %v134
    %v136 = vsel %vm75, %v110, 0.0
    %v137 = vrot.slane %v136, 4
    %v138 = vadd.f32 %v136, %v137
    %v139 = vrot.slane %v138, 2
    %v140 = vadd.f32 %v138, %v139
    %v141 = vrot.slane %v140, 1
    %v142 = vadd.f32 %v140, %v141
    %v143 = vmul.f32 %v121, 0.25
    %v144 = vmul.f32 %v128, 0.25
    %v145 = vmul.f32 %v135, 0.25
    %v146 = vmul.f32 %v142, 0.25
    %v147 = vld [vmem:[#allocation6] ss:$8 sm:$0x3]
    %vm152 = vcmask 1041409
    %v153 = vsel %vm152, %v96, %v82
    %v154 = vsel %vm152, %v103, %v89
    %157 = vrot.lane.b32.xlu0 %v153, 3
    %v158 = vpop.permute.xlu0 %157
    %159 = vrot.lane.b32.xlu0 %v154, 3
    %v160 = vpop.permute.xlu0 %159
    %v161 = vlaneseq
    %v162 = vand.u32 %v161, 127
    %vm163 = vcmp.lt.s32.totalorder %v162, 3
    %v164 = vsel %vm163, %v158, %v160
    %v165 = vsel %vm163, %v160, %v158
    %v167 = vperm.slane %v147, 0
    %v168 = vperm.slane %v147, 1
    %v171 = vmul.f32 %v167, %v165
    %v172 = vmul.f32 %v168, %v164
    %v177 = vsel %vm152, %v145, %v143
    %v178 = vsel %vm152, %v146, %v144
    %181 = vrot.lane.b32.xlu0 %v177, 3
    %v182 = vpop.permute.xlu0 %181
    %183 = vrot.lane.b32.xlu0 %v178, 3
    %v184 = vpop.permute.xlu0 %183
    %v185 = vsel %vm163, %v182, %v184
    %v186 = vsel %vm163, %v184, %v182
    %v187 = vmul.f32 %v167, %v186
    %v188 = vmul.f32 %v168, %v185
    %s189 = sld [smem:[#allocation2]]
    %s190 = sld [smem:[#allocation2 + $0x31]]
    %v191 = vstv %s189
    %v192 = vmul.f32 %v191, %v171
    %v193 = vmul.f32 %v191, %v172
    %v194 = vstv %s190
    %v195 = vmul.f32 %v194, %v187
    %v196 = vmul.f32 %v194, %v188
    %v197 = vadd.f32 %v192, %v195
    %v198 = vadd.f32 %v193, %v196
    %s199 = sld [smem:[#allocation2 + $0x7]]
    %s200 = sld [smem:[#allocation2 + $0x38]]
    %v201 = vstv %s199
    %v202 = vmul.f32 %v201, %v171
    %v203 = vmul.f32 %v201, %v172
    %v204 = vstv %s200
    %v205 = vmul.f32 %v204, %v187
    %v206 = vmul.f32 %v204, %v188
    %v207 = vadd.f32 %v202, %v205
    %v208 = vadd.f32 %v203, %v206
    %s209 = sld [smem:[#allocation2 + $0xe]]
    %s210 = sld [smem:[#allocation2 + $0x3f]]
    %v211 = vstv %s209
    %v212 = vmul.f32 %v211, %v171
    %v213 = vmul.f32 %v211, %v172
    %v214 = vstv %s210
    %v215 = vmul.f32 %v214, %v187
    %v216 = vmul.f32 %v214, %v188
    %v217 = vadd.f32 %v212, %v215
    %v218 = vadd.f32 %v213, %v216
    %s219 = sld [smem:[#allocation2 + $0x15]]
    %s220 = sld [smem:[#allocation2 + $0x46]]
    %v221 = vstv %s219
    %v222 = vmul.f32 %v221, %v171
    %v223 = vmul.f32 %v221, %v172
    %v224 = vstv %s220
    %v225 = vmul.f32 %v224, %v187
    %v226 = vmul.f32 %v224, %v188
    %v227 = vadd.f32 %v222, %v225
    %v228 = vadd.f32 %v223, %v226
    %s229 = sld [smem:[#allocation2 + $0x1c]]
    %s230 = sld [smem:[#allocation2 + $0x4d]]
    %v231 = vstv %s229
    %v232 = vmul.f32 %v231, %v171
    %v233 = vmul.f32 %v231, %v172
    %v234 = vstv %s230
    %v235 = vmul.f32 %v234, %v187
    %v236 = vmul.f32 %v234, %v188
    %v237 = vadd.f32 %v232, %v235
    %v238 = vadd.f32 %v233, %v236
    %s239 = sld [smem:[#allocation2 + $0x23]]
    %s240 = sld [smem:[#allocation2 + $0x54]]
    %v241 = vstv %s239
    %v242 = vmul.f32 %v241, %v171
    %v243 = vmul.f32 %v241, %v172
    %v244 = vstv %s240
    %v245 = vmul.f32 %v244, %v187
    %v246 = vmul.f32 %v244, %v188
    %v247 = vadd.f32 %v242, %v245
    %v248 = vadd.f32 %v243, %v246
    %s249 = sld [smem:[#allocation2 + $0x2a]]
    %s250 = sld [smem:[#allocation2 + $0x5b]]
    %v251 = vstv %s249
    %v252 = vmul.f32 %v251, %v171
    %v253 = vmul.f32 %v251, %v172
    %v254 = vstv %s250
    %v255 = vmul.f32 %v254, %v187
    %v256 = vmul.f32 %v254, %v188
    %v257 = vadd.f32 %v252, %v255
    %v258 = vadd.f32 %v253, %v256
    %s259 = scalar_lea.vmem [#allocation6], 1
    %v260 = vld [vmem:[%s259] ss:$8 sm:$0x3]
    %261 = vrot.lane.b32.xlu0 %v153, 2
    %v262 = vpop.permute.xlu0 %261
    %263 = vrot.lane.b32.xlu0 %v154, 2
    %v264 = vpop.permute.xlu0 %263
    %vm265 = vcmp.lt.s32.totalorder %v162, 2
    %v266 = vsel %vm265, %v262, %v264
    %v267 = vsel %vm265, %v264, %v262
    %v269 = vperm.slane %v260, 0
    %v270 = vperm.slane %v260, 1
    %v273 = vmul.f32 %v269, %v267
    %v274 = vmul.f32 %v270, %v266
    %275 = vrot.lane.b32.xlu0 %v177, 2
    %v276 = vpop.permute.xlu0 %275
    %277 = vrot.lane.b32.xlu0 %v178, 2
    %v278 = vpop.permute.xlu0 %277
    %v279 = vsel %vm265, %v276, %v278
    %v280 = vsel %vm265, %v278, %v276
    %v281 = vmul.f32 %v269, %v280
    %v282 = vmul.f32 %v270, %v279
    %s283 = sld [smem:[#allocation2 + $0x1]]
    %s284 = sld [smem:[#allocation2 + $0x32]]
    %v285 = vstv %s283
    %v286 = vmul.f32 %v285, %v273
    %v287 = vmul.f32 %v285, %v274
    %v288 = vstv %s284
    %v289 = vmul.f32 %v288, %v281
    %v290 = vmul.f32 %v288, %v282
    %v291 = vadd.f32 %v286, %v289
    %v292 = vadd.f32 %v287, %v290
    %v293 = vadd.f32 %v197, %v291
    %v294 = vadd.f32 %v198, %v292
    %s295 = sld [smem:[#allocation2 + $0x8]]
    %s296 = sld [smem:[#allocation2 + $0x39]]
    %v297 = vstv %s295
    %v298 = vmul.f32 %v297, %v273
    %v299 = vmul.f32 %v297, %v274
    %v300 = vstv %s296
    %v301 = vmul.f32 %v300, %v281
    %v302 = vmul.f32 %v300, %v282
    %v303 = vadd.f32 %v298, %v301
    %v304 = vadd.f32 %v299, %v302
    %v305 = vadd.f32 %v207, %v303
    %v306 = vadd.f32 %v208, %v304
    %s307 = sld [smem:[#allocation2 + $0xf]]
    %s308 = sld [smem:[#allocation2 + $0x40]]
    %v309 = vstv %s307
    %v310 = vmul.f32 %v309, %v273
    %v311 = vmul.f32 %v309, %v274
    %v312 = vstv %s308
    %v313 = vmul.f32 %v312, %v281
    %v314 = vmul.f32 %v312, %v282
    %v315 = vadd.f32 %v310, %v313
    %v316 = vadd.f32 %v311, %v314
    %v317 = vadd.f32 %v217, %v315
    %v318 = vadd.f32 %v218, %v316
    %s319 = sld [smem:[#allocation2 + $0x16]]
    %s320 = sld [smem:[#allocation2 + $0x47]]
    %v321 = vstv %s319
    %v322 = vmul.f32 %v321, %v273
    %v323 = vmul.f32 %v321, %v274
    %v324 = vstv %s320
    %v325 = vmul.f32 %v324, %v281
    %v326 = vmul.f32 %v324, %v282
    %v327 = vadd.f32 %v322, %v325
    %v328 = vadd.f32 %v323, %v326
    %v329 = vadd.f32 %v227, %v327
    %v330 = vadd.f32 %v228, %v328
    %s331 = sld [smem:[#allocation2 + $0x1d]]
    %s332 = sld [smem:[#allocation2 + $0x4e]]
    %v333 = vstv %s331
    %v334 = vmul.f32 %v333, %v273
    %v335 = vmul.f32 %v333, %v274
    %v336 = vstv %s332
    %v337 = vmul.f32 %v336, %v281
    %v338 = vmul.f32 %v336, %v282
    %v339 = vadd.f32 %v334, %v337
    %v340 = vadd.f32 %v335, %v338
    %v341 = vadd.f32 %v237, %v339
    %v342 = vadd.f32 %v238, %v340
    %s343 = sld [smem:[#allocation2 + $0x24]]
    %s344 = sld [smem:[#allocation2 + $0x55]]
    %v345 = vstv %s343
    %v346 = vmul.f32 %v345, %v273
    %v347 = vmul.f32 %v345, %v274
    %v348 = vstv %s344
    %v349 = vmul.f32 %v348, %v281
    %v350 = vmul.f32 %v348, %v282
    %v351 = vadd.f32 %v346, %v349
    %v352 = vadd.f32 %v347, %v350
    %v353 = vadd.f32 %v247, %v351
    %v354 = vadd.f32 %v248, %v352
    %s355 = sld [smem:[#allocation2 + $0x2b]]
    %s356 = sld [smem:[#allocation2 + $0x5c]]
    %v357 = vstv %s355
    %v358 = vmul.f32 %v357, %v273
    %v359 = vmul.f32 %v357, %v274
    %v360 = vstv %s356
    %v361 = vmul.f32 %v360, %v281
    %v362 = vmul.f32 %v360, %v282
    %v363 = vadd.f32 %v358, %v361
    %v364 = vadd.f32 %v359, %v362
    %v365 = vadd.f32 %v257, %v363
    %v366 = vadd.f32 %v258, %v364
    %s367 = scalar_lea.vmem [#allocation6], 2
    %v368 = vld [vmem:[%s367] ss:$8 sm:$0x3]
    %369 = vrot.lane.b32.xlu0 %v153, 1
    %v370 = vpop.permute.xlu0 %369
    %371 = vrot.lane.b32.xlu0 %v154, 1
    %v372 = vpop.permute.xlu0 %371
    %vm373 = vcmp.lt.s32.totalorder %v162, 1
    %v374 = vsel %vm373, %v370, %v372
    %v375 = vsel %vm373, %v372, %v370
    %v377 = vperm.slane %v368, 0
    %v378 = vperm.slane %v368, 1
    %v381 = vmul.f32 %v377, %v375
    %v382 = vmul.f32 %v378, %v374
    %383 = vrot.lane.b32.xlu0 %v177, 1
    %v384 = vpop.permute.xlu0 %383
    %385 = vrot.lane.b32.xlu0 %v178, 1
    %v386 = vpop.permute.xlu0 %385
    %v387 = vsel %vm373, %v384, %v386
    %v388 = vsel %vm373, %v386, %v384
    %v389 = vmul.f32 %v377, %v388
    %v390 = vmul.f32 %v378, %v387
    %s391 = sld [smem:[#allocation2 + $0x2]]
    %s392 = sld [smem:[#allocation2 + $0x33]]
    %v393 = vstv %s391
    %v394 = vmul.f32 %v393, %v381
    %v395 = vmul.f32 %v393, %v382
    %v396 = vstv %s392
    %v397 = vmul.f32 %v396, %v389
    %v398 = vmul.f32 %v396, %v390
    %v399 = vadd.f32 %v394, %v397
    %v400 = vadd.f32 %v395, %v398
    %v401 = vadd.f32 %v293, %v399
    %v402 = vadd.f32 %v294, %v400
    %s403 = sld [smem:[#allocation2 + $0x9]]
    %s404 = sld [smem:[#allocation2 + $0x3a]]
    %v405 = vstv %s403
    %v406 = vmul.f32 %v405, %v381
    %v407 = vmul.f32 %v405, %v382
    %v408 = vstv %s404
    %v409 = vmul.f32 %v408, %v389
    %v410 = vmul.f32 %v408, %v390
    %v411 = vadd.f32 %v406, %v409
    %v412 = vadd.f32 %v407, %v410
    %v413 = vadd.f32 %v305, %v411
    %v414 = vadd.f32 %v306, %v412
    %s415 = sld [smem:[#allocation2 + $0x10]]
    %s416 = sld [smem:[#allocation2 + $0x41]]
    %v417 = vstv %s415
    %v418 = vmul.f32 %v417, %v381
    %v419 = vmul.f32 %v417, %v382
    %v420 = vstv %s416
    %v421 = vmul.f32 %v420, %v389
    %v422 = vmul.f32 %v420, %v390
    %v423 = vadd.f32 %v418, %v421
    %v424 = vadd.f32 %v419, %v422
    %v425 = vadd.f32 %v317, %v423
    %v426 = vadd.f32 %v318, %v424
    %s427 = sld [smem:[#allocation2 + $0x17]]
    %s428 = sld [smem:[#allocation2 + $0x48]]
    %v429 = vstv %s427
    %v430 = vmul.f32 %v429, %v381
    %v431 = vmul.f32 %v429, %v382
    %v432 = vstv %s428
    %v433 = vmul.f32 %v432, %v389
    %v434 = vmul.f32 %v432, %v390
    %v435 = vadd.f32 %v430, %v433
    %v436 = vadd.f32 %v431, %v434
    %v437 = vadd.f32 %v329, %v435
    %v438 = vadd.f32 %v330, %v436
    %s439 = sld [smem:[#allocation2 + $0x1e]]
    %s440 = sld [smem:[#allocation2 + $0x4f]]
    %v441 = vstv %s439
    %v442 = vmul.f32 %v441, %v381
    %v443 = vmul.f32 %v441, %v382
    %v444 = vstv %s440
    %v445 = vmul.f32 %v444, %v389
    %v446 = vmul.f32 %v444, %v390
    %v447 = vadd.f32 %v442, %v445
    %v448 = vadd.f32 %v443, %v446
    %v449 = vadd.f32 %v341, %v447
    %v450 = vadd.f32 %v342, %v448
    %s451 = sld [smem:[#allocation2 + $0x25]]
    %s452 = sld [smem:[#allocation2 + $0x56]]
    %v453 = vstv %s451
    %v454 = vmul.f32 %v453, %v381
    %v455 = vmul.f32 %v453, %v382
    %v456 = vstv %s452
    %v457 = vmul.f32 %v456, %v389
    %v458 = vmul.f32 %v456, %v390
    %v459 = vadd.f32 %v454, %v457
    %v460 = vadd.f32 %v455, %v458
    %v461 = vadd.f32 %v353, %v459
    %v462 = vadd.f32 %v354, %v460
    %s463 = sld [smem:[#allocation2 + $0x2c]]
    %s464 = sld [smem:[#allocation2 + $0x5d]]
    %v465 = vstv %s463
    %v466 = vmul.f32 %v465, %v381
    %v467 = vmul.f32 %v465, %v382
    %v468 = vstv %s464
    %v469 = vmul.f32 %v468, %v389
    %v470 = vmul.f32 %v468, %v390
    %v471 = vadd.f32 %v466, %v469
    %v472 = vadd.f32 %v467, %v470
    %v473 = vadd.f32 %v365, %v471
    %v474 = vadd.f32 %v366, %v472
    %s475 = sld [smem:[#allocation2 + $0x3]]
    %s476 = sld [smem:[#allocation2 + $0x34]]
    %v477 = vstv %s475
    %v478 = vmul.f32 %v477, %v82
    %v479 = vmul.f32 %v477, %v89
    %v480 = vmul.f32 %v477, %v96
    %v481 = vmul.f32 %v477, %v103
    %v482 = vstv %s476
    %v483 = vmul.f32 %v482, %v143
    %v484 = vmul.f32 %v482, %v144
    %v485 = vmul.f32 %v482, %v145
    %v486 = vmul.f32 %v482, %v146
    %v487 = vadd.f32 %v478, %v483
    %v488 = vadd.f32 %v479, %v484
    %v489 = vadd.f32 %v480, %v485
    %v490 = vadd.f32 %v481, %v486
    %v495 = vsel %vm152, %v489, %v487
    %v496 = vsel %vm152, %v490, %v488
    %v499 = vadd.f32 %v401, %v495
    %v500 = vadd.f32 %v402, %v496
    %s501 = sld [smem:[#allocation2 + $0xa]]
    %s502 = sld [smem:[#allocation2 + $0x3b]]
    %v503 = vstv %s501
    %v504 = vmul.f32 %v503, %v82
    %v505 = vmul.f32 %v503, %v89
    %v506 = vmul.f32 %v503, %v96
    %v507 = vmul.f32 %v503, %v103
    %v508 = vstv %s502
    %v509 = vmul.f32 %v508, %v143
    %v510 = vmul.f32 %v508, %v144
    %v511 = vmul.f32 %v508, %v145
    %v512 = vmul.f32 %v508, %v146
    %v513 = vadd.f32 %v504, %v509
    %v514 = vadd.f32 %v505, %v510
    %v515 = vadd.f32 %v506, %v511
    %v516 = vadd.f32 %v507, %v512
    %v521 = vsel %vm152, %v515, %v513
    %v522 = vsel %vm152, %v516, %v514
    %v525 = vadd.f32 %v413, %v521
    %v526 = vadd.f32 %v414, %v522
    %s527 = sld [smem:[#allocation2 + $0x11]]
    %s528 = sld [smem:[#allocation2 + $0x42]]
    %v529 = vstv %s527
    %v530 = vmul.f32 %v529, %v82
    %v531 = vmul.f32 %v529, %v89
    %v532 = vmul.f32 %v529, %v96
    %v533 = vmul.f32 %v529, %v103
    %v534 = vstv %s528
    %v535 = vmul.f32 %v534, %v143
    %v536 = vmul.f32 %v534, %v144
    %v537 = vmul.f32 %v534, %v145
    %v538 = vmul.f32 %v534, %v146
    %v539 = vadd.f32 %v530, %v535
    %v540 = vadd.f32 %v531, %v536
    %v541 = vadd.f32 %v532, %v537
    %v542 = vadd.f32 %v533, %v538
    %v547 = vsel %vm152, %v541, %v539
    %v548 = vsel %vm152, %v542, %v540
    %v551 = vadd.f32 %v425, %v547
    %v552 = vadd.f32 %v426, %v548
    %s553 = sld [smem:[#allocation2 + $0x18]]
    %s554 = sld [smem:[#allocation2 + $0x49]]
    %v555 = vstv %s553
    %v556 = vmul.f32 %v555, %v82
    %v557 = vmul.f32 %v555, %v89
    %v558 = vmul.f32 %v555, %v96
    %v559 = vmul.f32 %v555, %v103
    %v560 = vstv %s554
    %v561 = vmul.f32 %v560, %v143
    %v562 = vmul.f32 %v560, %v144
    %v563 = vmul.f32 %v560, %v145
    %v564 = vmul.f32 %v560, %v146
    %v565 = vadd.f32 %v556, %v561
    %v566 = vadd.f32 %v557, %v562
    %v567 = vadd.f32 %v558, %v563
    %v568 = vadd.f32 %v559, %v564
    %v573 = vsel %vm152, %v567, %v565
    %v574 = vsel %vm152, %v568, %v566
    %v577 = vadd.f32 %v437, %v573
    %v578 = vadd.f32 %v438, %v574
    %s579 = sld [smem:[#allocation2 + $0x1f]]
    %s580 = sld [smem:[#allocation2 + $0x50]]
    %v581 = vstv %s579
    %v582 = vmul.f32 %v581, %v82
    %v583 = vmul.f32 %v581, %v89
    %v584 = vmul.f32 %v581, %v96
    %v585 = vmul.f32 %v581, %v103
    %v586 = vstv %s580
    %v587 = vmul.f32 %v586, %v143
    %v588 = vmul.f32 %v586, %v144
    %v589 = vmul.f32 %v586, %v145
    %v590 = vmul.f32 %v586, %v146
    %v591 = vadd.f32 %v582, %v587
    %v592 = vadd.f32 %v583, %v588
    %v593 = vadd.f32 %v584, %v589
    %v594 = vadd.f32 %v585, %v590
    %v599 = vsel %vm152, %v593, %v591
    %v600 = vsel %vm152, %v594, %v592
    %v603 = vadd.f32 %v449, %v599
    %v604 = vadd.f32 %v450, %v600
    %s605 = sld [smem:[#allocation2 + $0x26]]
    %s606 = sld [smem:[#allocation2 + $0x57]]
    %v607 = vstv %s605
    %v608 = vmul.f32 %v607, %v82
    %v609 = vmul.f32 %v607, %v89
    %v610 = vmul.f32 %v607, %v96
    %v611 = vmul.f32 %v607, %v103
    %v612 = vstv %s606
    %v613 = vmul.f32 %v612, %v143
    %v614 = vmul.f32 %v612, %v144
    %v615 = vmul.f32 %v612, %v145
    %v616 = vmul.f32 %v612, %v146
    %v617 = vadd.f32 %v608, %v613
    %v618 = vadd.f32 %v609, %v614
    %v619 = vadd.f32 %v610, %v615
    %v620 = vadd.f32 %v611, %v616
    %v625 = vsel %vm152, %v619, %v617
    %v626 = vsel %vm152, %v620, %v618
    %v629 = vadd.f32 %v461, %v625
    %v630 = vadd.f32 %v462, %v626
    %s631 = sld [smem:[#allocation2 + $0x2d]]
    %s632 = sld [smem:[#allocation2 + $0x5e]]
    %v633 = vstv %s631
    %v634 = vmul.f32 %v633, %v82
    %v635 = vmul.f32 %v633, %v89
    %v636 = vmul.f32 %v633, %v96
    %v637 = vmul.f32 %v633, %v103
    %v638 = vstv %s632
    %v639 = vmul.f32 %v638, %v143
    %v640 = vmul.f32 %v638, %v144
    %v641 = vmul.f32 %v638, %v145
    %v642 = vmul.f32 %v638, %v146
    %v643 = vadd.f32 %v634, %v639
    %v644 = vadd.f32 %v635, %v640
    %v645 = vadd.f32 %v636, %v641
    %v646 = vadd.f32 %v637, %v642
    %v651 = vsel %vm152, %v645, %v643
    %v652 = vsel %vm152, %v646, %v644
    %v655 = vadd.f32 %v473, %v651
    %v656 = vadd.f32 %v474, %v652
    %s657 = scalar_lea.vmem [#allocation6], 4
    %v658 = vld [vmem:[%s657] ss:$8 sm:$0x3]
    %659 = vrot.lane.b32.xlu0 %v153, 127
    %v660 = vpop.permute.xlu0 %659
    %661 = vrot.lane.b32.xlu0 %v154, 127
    %v662 = vpop.permute.xlu0 %661
    %vm663 = vcmp.lt.s32.totalorder %v162, 127
    %v664 = vsel %vm663, %v660, %v662
    %v665 = vsel %vm663, %v662, %v660
    %v667 = vperm.slane %v658, 0
    %v668 = vperm.slane %v658, 1
    %v671 = vmul.f32 %v667, %v664
    %v672 = vmul.f32 %v668, %v665
    %673 = vrot.lane.b32.xlu0 %v177, 127
    %v674 = vpop.permute.xlu0 %673
    %675 = vrot.lane.b32.xlu0 %v178, 127
    %v676 = vpop.permute.xlu0 %675
    %v677 = vsel %vm663, %v674, %v676
    %v678 = vsel %vm663, %v676, %v674
    %v679 = vmul.f32 %v667, %v677
    %v680 = vmul.f32 %v668, %v678
    %s681 = sld [smem:[#allocation2 + $0x4]]
    %s682 = sld [smem:[#allocation2 + $0x35]]
    %v683 = vstv %s681
    %v684 = vmul.f32 %v683, %v671
    %v685 = vmul.f32 %v683, %v672
    %v686 = vstv %s682
    %v687 = vmul.f32 %v686, %v679
    %v688 = vmul.f32 %v686, %v680
    %v689 = vadd.f32 %v684, %v687
    %v690 = vadd.f32 %v685, %v688
    %v691 = vadd.f32 %v499, %v689
    %v692 = vadd.f32 %v500, %v690
    %s693 = sld [smem:[#allocation2 + $0xb]]
    %s694 = sld [smem:[#allocation2 + $0x3c]]
    %v695 = vstv %s693
    %v696 = vmul.f32 %v695, %v671
    %v697 = vmul.f32 %v695, %v672
    %v698 = vstv %s694
    %v699 = vmul.f32 %v698, %v679
    %v700 = vmul.f32 %v698, %v680
    %v701 = vadd.f32 %v696, %v699
    %v702 = vadd.f32 %v697, %v700
    %v703 = vadd.f32 %v525, %v701
    %v704 = vadd.f32 %v526, %v702
    %s705 = sld [smem:[#allocation2 + $0x12]]
    %s706 = sld [smem:[#allocation2 + $0x43]]
    %v707 = vstv %s705
    %v708 = vmul.f32 %v707, %v671
    %v709 = vmul.f32 %v707, %v672
    %v710 = vstv %s706
    %v711 = vmul.f32 %v710, %v679
    %v712 = vmul.f32 %v710, %v680
    %v713 = vadd.f32 %v708, %v711
    %v714 = vadd.f32 %v709, %v712
    %v715 = vadd.f32 %v551, %v713
    %v716 = vadd.f32 %v552, %v714
    %s717 = sld [smem:[#allocation2 + $0x19]]
    %s718 = sld [smem:[#allocation2 + $0x4a]]
    %v719 = vstv %s717
    %v720 = vmul.f32 %v719, %v671
    %v721 = vmul.f32 %v719, %v672
    %v722 = vstv %s718
    %v723 = vmul.f32 %v722, %v679
    %v724 = vmul.f32 %v722, %v680
    %v725 = vadd.f32 %v720, %v723
    %v726 = vadd.f32 %v721, %v724
    %v727 = vadd.f32 %v577, %v725
    %v728 = vadd.f32 %v578, %v726
    %s729 = sld [smem:[#allocation2 + $0x20]]
    %s730 = sld [smem:[#allocation2 + $0x51]]
    %v731 = vstv %s729
    %v732 = vmul.f32 %v731, %v671
    %v733 = vmul.f32 %v731, %v672
    %v734 = vstv %s730
    %v735 = vmul.f32 %v734, %v679
    %v736 = vmul.f32 %v734, %v680
    %v737 = vadd.f32 %v732, %v735
    %v738 = vadd.f32 %v733, %v736
    %v739 = vadd.f32 %v603, %v737
    %v740 = vadd.f32 %v604, %v738
    %s741 = sld [smem:[#allocation2 + $0x27]]
    %s742 = sld [smem:[#allocation2 + $0x58]]
    %v743 = vstv %s741
    %v744 = vmul.f32 %v743, %v671
    %v745 = vmul.f32 %v743, %v672
    %v746 = vstv %s742
    %v747 = vmul.f32 %v746, %v679
    %v748 = vmul.f32 %v746, %v680
    %v749 = vadd.f32 %v744, %v747
    %v750 = vadd.f32 %v745, %v748
    %v751 = vadd.f32 %v629, %v749
    %v752 = vadd.f32 %v630, %v750
    %s753 = sld [smem:[#allocation2 + $0x2e]]
    %s754 = sld [smem:[#allocation2 + $0x5f]]
    %v755 = vstv %s753
    %v756 = vmul.f32 %v755, %v671
    %v757 = vmul.f32 %v755, %v672
    %v758 = vstv %s754
    %v759 = vmul.f32 %v758, %v679
    %v760 = vmul.f32 %v758, %v680
    %v761 = vadd.f32 %v756, %v759
    %v762 = vadd.f32 %v757, %v760
    %v763 = vadd.f32 %v655, %v761
    %v764 = vadd.f32 %v656, %v762
    %s765 = scalar_lea.vmem [#allocation6], 5
    %v766 = vld [vmem:[%s765] ss:$8 sm:$0x3]
    %767 = vrot.lane.b32.xlu0 %v153, 126
    %v768 = vpop.permute.xlu0 %767
    %769 = vrot.lane.b32.xlu0 %v154, 126
    %v770 = vpop.permute.xlu0 %769
    %vm771 = vcmp.lt.s32.totalorder %v162, 126
    %v772 = vsel %vm771, %v768, %v770
    %v773 = vsel %vm771, %v770, %v768
    %v775 = vperm.slane %v766, 0
    %v776 = vperm.slane %v766, 1
    %v779 = vmul.f32 %v775, %v772
    %v780 = vmul.f32 %v776, %v773
    %781 = vrot.lane.b32.xlu0 %v177, 126
    %v782 = vpop.permute.xlu0 %781
    %783 = vrot.lane.b32.xlu0 %v178, 126
    %v784 = vpop.permute.xlu0 %783
    %v785 = vsel %vm771, %v782, %v784
    %v786 = vsel %vm771, %v784, %v782
    %v787 = vmul.f32 %v775, %v785
    %v788 = vmul.f32 %v776, %v786
    %s789 = sld [smem:[#allocation2 + $0x5]]
    %s790 = sld [smem:[#allocation2 + $0x36]]
    %v791 = vstv %s789
    %v792 = vmul.f32 %v791, %v779
    %v793 = vmul.f32 %v791, %v780
    %v794 = vstv %s790
    %v795 = vmul.f32 %v794, %v787
    %v796 = vmul.f32 %v794, %v788
    %v797 = vadd.f32 %v792, %v795
    %v798 = vadd.f32 %v793, %v796
    %v799 = vadd.f32 %v691, %v797
    %v800 = vadd.f32 %v692, %v798
    %s801 = sld [smem:[#allocation2 + $0xc]]
    %s802 = sld [smem:[#allocation2 + $0x3d]]
    %v803 = vstv %s801
    %v804 = vmul.f32 %v803, %v779
    %v805 = vmul.f32 %v803, %v780
    %v806 = vstv %s802
    %v807 = vmul.f32 %v806, %v787
    %v808 = vmul.f32 %v806, %v788
    %v809 = vadd.f32 %v804, %v807
    %v810 = vadd.f32 %v805, %v808
    %v811 = vadd.f32 %v703, %v809
    %v812 = vadd.f32 %v704, %v810
    %s813 = sld [smem:[#allocation2 + $0x13]]
    %s814 = sld [smem:[#allocation2 + $0x44]]
    %v815 = vstv %s813
    %v816 = vmul.f32 %v815, %v779
    %v817 = vmul.f32 %v815, %v780
    %v818 = vstv %s814
    %v819 = vmul.f32 %v818, %v787
    %v820 = vmul.f32 %v818, %v788
    %v821 = vadd.f32 %v816, %v819
    %v822 = vadd.f32 %v817, %v820
    %v823 = vadd.f32 %v715, %v821
    %v824 = vadd.f32 %v716, %v822
    %s825 = sld [smem:[#allocation2 + $0x1a]]
    %s826 = sld [smem:[#allocation2 + $0x4b]]
    %v827 = vstv %s825
    %v828 = vmul.f32 %v827, %v779
    %v829 = vmul.f32 %v827, %v780
    %v830 = vstv %s826
    %v831 = vmul.f32 %v830, %v787
    %v832 = vmul.f32 %v830, %v788
    %v833 = vadd.f32 %v828, %v831
    %v834 = vadd.f32 %v829, %v832
    %v835 = vadd.f32 %v727, %v833
    %v836 = vadd.f32 %v728, %v834
    %s837 = sld [smem:[#allocation2 + $0x21]]
    %s838 = sld [smem:[#allocation2 + $0x52]]
    %v839 = vstv %s837
    %v840 = vmul.f32 %v839, %v779
    %v841 = vmul.f32 %v839, %v780
    %v842 = vstv %s838
    %v843 = vmul.f32 %v842, %v787
    %v844 = vmul.f32 %v842, %v788
    %v845 = vadd.f32 %v840, %v843
    %v846 = vadd.f32 %v841, %v844
    %v847 = vadd.f32 %v739, %v845
    %v848 = vadd.f32 %v740, %v846
    %s849 = sld [smem:[#allocation2 + $0x28]]
    %s850 = sld [smem:[#allocation2 + $0x59]]
    %v851 = vstv %s849
    %v852 = vmul.f32 %v851, %v779
    %v853 = vmul.f32 %v851, %v780
    %v854 = vstv %s850
    %v855 = vmul.f32 %v854, %v787
    %v856 = vmul.f32 %v854, %v788
    %v857 = vadd.f32 %v852, %v855
    %v858 = vadd.f32 %v853, %v856
    %v859 = vadd.f32 %v751, %v857
    %v860 = vadd.f32 %v752, %v858
    %s861 = sld [smem:[#allocation2 + $0x2f]]
    %s862 = sld [smem:[#allocation2 + $0x60]]
    %v863 = vstv %s861
    %v864 = vmul.f32 %v863, %v779
    %v865 = vmul.f32 %v863, %v780
    %v866 = vstv %s862
    %v867 = vmul.f32 %v866, %v787
    %v868 = vmul.f32 %v866, %v788
    %v869 = vadd.f32 %v864, %v867
    %v870 = vadd.f32 %v865, %v868
    %v871 = vadd.f32 %v763, %v869
    %v872 = vadd.f32 %v764, %v870
    %s873 = scalar_lea.vmem [#allocation6], 6
    %v874 = vld [vmem:[%s873] ss:$8 sm:$0x3]
    %875 = vrot.lane.b32.xlu0 %v153, 125
    %v876 = vpop.permute.xlu0 %875
    %877 = vrot.lane.b32.xlu0 %v154, 125
    %v878 = vpop.permute.xlu0 %877
    %vm879 = vcmp.lt.s32.totalorder %v162, 125
    %v880 = vsel %vm879, %v876, %v878
    %v881 = vsel %vm879, %v878, %v876
    %v883 = vperm.slane %v874, 0
    %v884 = vperm.slane %v874, 1
    %v887 = vmul.f32 %v883, %v880
    %v888 = vmul.f32 %v884, %v881
    %889 = vrot.lane.b32.xlu0 %v177, 125
    %v890 = vpop.permute.xlu0 %889
    %891 = vrot.lane.b32.xlu0 %v178, 125
    %v892 = vpop.permute.xlu0 %891
    %v893 = vsel %vm879, %v890, %v892
    %v894 = vsel %vm879, %v892, %v890
    %v895 = vmul.f32 %v883, %v893
    %v896 = vmul.f32 %v884, %v894
    %s897 = sld [smem:[#allocation2 + $0x6]]
    %s898 = sld [smem:[#allocation2 + $0x37]]
    %v899 = vstv %s897
    %v900 = vmul.f32 %v899, %v887
    %v901 = vmul.f32 %v899, %v888
    %v902 = vstv %s898
    %v903 = vmul.f32 %v902, %v895
    %v904 = vmul.f32 %v902, %v896
    %v905 = vadd.f32 %v900, %v903
    %v906 = vadd.f32 %v901, %v904
    %v907 = vadd.f32 %v799, %v905
    %v908 = vadd.f32 %v800, %v906
    %s909 = sld [smem:[#allocation2 + $0xd]]
    %s910 = sld [smem:[#allocation2 + $0x3e]]
    %v911 = vstv %s909
    %v912 = vmul.f32 %v911, %v887
    %v913 = vmul.f32 %v911, %v888
    %v914 = vstv %s910
    %v915 = vmul.f32 %v914, %v895
    %v916 = vmul.f32 %v914, %v896
    %v917 = vadd.f32 %v912, %v915
    %v918 = vadd.f32 %v913, %v916
    %v919 = vadd.f32 %v811, %v917
    %v920 = vadd.f32 %v812, %v918
    %s921 = sld [smem:[#allocation2 + $0x14]]
    %s922 = sld [smem:[#allocation2 + $0x45]]
    %v923 = vstv %s921
    %v924 = vmul.f32 %v923, %v887
    %v925 = vmul.f32 %v923, %v888
    %v926 = vstv %s922
    %v927 = vmul.f32 %v926, %v895
    %v928 = vmul.f32 %v926, %v896
    %v929 = vadd.f32 %v924, %v927
    %v930 = vadd.f32 %v925, %v928
    %v931 = vadd.f32 %v823, %v929
    %v932 = vadd.f32 %v824, %v930
    %s933 = sld [smem:[#allocation2 + $0x1b]]
    %s934 = sld [smem:[#allocation2 + $0x4c]]
    %v935 = vstv %s933
    %v936 = vmul.f32 %v935, %v887
    %v937 = vmul.f32 %v935, %v888
    %v938 = vstv %s934
    %v939 = vmul.f32 %v938, %v895
    %v940 = vmul.f32 %v938, %v896
    %v941 = vadd.f32 %v936, %v939
    %v942 = vadd.f32 %v937, %v940
    %v943 = vadd.f32 %v835, %v941
    %v944 = vadd.f32 %v836, %v942
    %s945 = sld [smem:[#allocation2 + $0x22]]
    %s946 = sld [smem:[#allocation2 + $0x53]]
    %v947 = vstv %s945
    %v948 = vmul.f32 %v947, %v887
    %v949 = vmul.f32 %v947, %v888
    %v950 = vstv %s946
    %v951 = vmul.f32 %v950, %v895
    %v952 = vmul.f32 %v950, %v896
    %v953 = vadd.f32 %v948, %v951
    %v954 = vadd.f32 %v949, %v952
    %v955 = vadd.f32 %v847, %v953
    %v956 = vadd.f32 %v848, %v954
    %s957 = sld [smem:[#allocation2 + $0x29]]
    %s958 = sld [smem:[#allocation2 + $0x5a]]
    %v959 = vstv %s957
    %v960 = vmul.f32 %v959, %v887
    %v961 = vmul.f32 %v959, %v888
    %v962 = vstv %s958
    %v963 = vmul.f32 %v962, %v895
    %v964 = vmul.f32 %v962, %v896
    %v965 = vadd.f32 %v960, %v963
    %v966 = vadd.f32 %v961, %v964
    %v967 = vadd.f32 %v859, %v965
    %v968 = vadd.f32 %v860, %v966
    %s969 = sld [smem:[#allocation2 + $0x30]]
    %s970 = sld [smem:[#allocation2 + $0x61]]
    %v971 = vstv %s969
    %v972 = vmul.f32 %v971, %v887
    %v973 = vmul.f32 %v971, %v888
    %v974 = vstv %s970
    %v975 = vmul.f32 %v974, %v895
    %v976 = vmul.f32 %v974, %v896
    %v977 = vadd.f32 %v972, %v975
    %v978 = vadd.f32 %v973, %v976
    %v979 = vadd.f32 %v871, %v977
    %v980 = vadd.f32 %v872, %v978
    %s981 = scalar_lea.vmem [#allocation6], 7
    %v982 = vld [vmem:[%s981] ss:$8 sm:$0x3]
    %983 = vrot.lane.b32.xlu0 %v907, 48
    %v984 = vpop.permute.xlu0 %983
    %985 = vrot.lane.b32.xlu0 %v908, 48
    %v986 = vpop.permute.xlu0 %985
    %vm987 = vcmp.lt.s32.totalorder %v162, 48
    %v988 = vsel %vm987, %v984, %v986
    %v989 = vsel %vm987, %v986, %v984
    %v991 = vperm.slane %v982, 0
    %v992 = vperm.slane %v982, 1
    %v995 = vmul.f32 %v991, %v989
    %v996 = vmul.f32 %v992, %v988
    %s997 = scalar_lea.vmem [#allocation6], 16
    %v998 = vld [vmem:[%s997] ss:$8 sm:$0x3]
    %999 = vrot.lane.b32.xlu0 %v919, 32
    %v1000 = vpop.permute.xlu0 %999
    %1001 = vrot.lane.b32.xlu0 %v920, 32
    %v1002 = vpop.permute.xlu0 %1001
    %vm1003 = vcmp.lt.s32.totalorder %v162, 32
    %v1004 = vsel %vm1003, %v1000, %v1002
    %v1005 = vsel %vm1003, %v1002, %v1000
    %v1007 = vperm.slane %v998, 0
    %v1008 = vperm.slane %v998, 1
    %v1011 = vmul.f32 %v1007, %v1005
    %v1012 = vmul.f32 %v1008, %v1004
    %v1013 = vadd.f32 %v995, %v1011
    %v1014 = vadd.f32 %v996, %v1012
    %s1015 = scalar_lea.vmem [#allocation6], 17
    %v1016 = vld [vmem:[%s1015] ss:$8 sm:$0x3]
    %1017 = vrot.lane.b32.xlu0 %v931, 16
    %v1018 = vpop.permute.xlu0 %1017
    %1019 = vrot.lane.b32.xlu0 %v932, 16
    %v1020 = vpop.permute.xlu0 %1019
    %vm1021 = vcmp.lt.s32.totalorder %v162, 16
    %v1022 = vsel %vm1021, %v1018, %v1020
    %v1023 = vsel %vm1021, %v1020, %v1018
    %v1025 = vperm.slane %v1016, 0
    %v1026 = vperm.slane %v1016, 1
    %v1029 = vmul.f32 %v1025, %v1023
    %v1030 = vmul.f32 %v1026, %v1022
    %v1031 = vadd.f32 %v1013, %v1029
    %v1032 = vadd.f32 %v1014, %v1030
    %v1033 = vadd.f32 %v1031, %v943
    %v1034 = vadd.f32 %v1032, %v944
    %s1035 = scalar_lea.vmem [#allocation6], 19
    %v1036 = vld [vmem:[%s1035] ss:$8 sm:$0x3]
    %1037 = vrot.lane.b32.xlu0 %v955, 112
    %v1038 = vpop.permute.xlu0 %1037
    %1039 = vrot.lane.b32.xlu0 %v956, 112
    %v1040 = vpop.permute.xlu0 %1039
    %vm1041 = vcmp.lt.s32.totalorder %v162, 112
    %v1042 = vsel %vm1041, %v1038, %v1040
    %v1043 = vsel %vm1041, %v1040, %v1038
    %v1045 = vperm.slane %v1036, 0
    %v1046 = vperm.slane %v1036, 1
    %v1049 = vmul.f32 %v1045, %v1042
    %v1050 = vmul.f32 %v1046, %v1043
    %v1051 = vadd.f32 %v1033, %v1049
    %v1052 = vadd.f32 %v1034, %v1050
    %s1053 = scalar_lea.vmem [#allocation6], 20
    %v1054 = vld [vmem:[%s1053] ss:$8 sm:$0x3]
    %1055 = vrot.lane.b32.xlu0 %v967, 96
    %v1056 = vpop.permute.xlu0 %1055
    %1057 = vrot.lane.b32.xlu0 %v968, 96
    %v1058 = vpop.permute.xlu0 %1057
    %vm1059 = vcmp.lt.s32.totalorder %v162, 96
    %v1060 = vsel %vm1059, %v1056, %v1058
    %v1061 = vsel %vm1059, %v1058, %v1056
    %v1063 = vperm.slane %v1054, 0
    %v1064 = vperm.slane %v1054, 1
    %v1067 = vmul.f32 %v1063, %v1060
    %v1068 = vmul.f32 %v1064, %v1061
    %v1069 = vadd.f32 %v1051, %v1067
    %v1070 = vadd.f32 %v1052, %v1068
    %s1071 = scalar_lea.vmem [#allocation6], 21
    %v1072 = vld [vmem:[%s1071] ss:$8 sm:$0x3]
    %1073 = vrot.lane.b32.xlu0 %v979, 80
    %v1074 = vpop.permute.xlu0 %1073
    %1075 = vrot.lane.b32.xlu0 %v980, 80
    %v1076 = vpop.permute.xlu0 %1075
    %vm1077 = vcmp.lt.s32.totalorder %v162, 80
    %v1078 = vsel %vm1077, %v1074, %v1076
    %v1079 = vsel %vm1077, %v1076, %v1074
    %v1081 = vperm.slane %v1072, 0
    %v1082 = vperm.slane %v1072, 1
    %v1085 = vmul.f32 %v1081, %v1078
    %v1086 = vmul.f32 %v1082, %v1079
    %v1087 = vadd.f32 %v1069, %v1085
    %v1088 = vadd.f32 %v1070, %v1086
    %v1089 = vxor.u32 %v1087, 2147483648
    %v1090 = vxor.u32 %v1088, 2147483648
    %v1091 = vmul.f32 %v1089, 1.442695
    %v1092 = vpow.pop %v1091
    %v1093 = vmul.f32 %v1090, 1.442695
    %v1094 = vpow.pop %v1093
    %v1095 = vadd.f32 %v1092, 1.0
    %v1096 = vadd.f32 %v1094, 1.0
    %v1097 = vrcp.pop %v1095
    %v1098 = vmul.f32 %v1095, %v1097
    %v1099 = vsub.f32 1.0, %v1098
    %v1100 = vmul.f32 %v1097, %v1099
    %v1101 = vadd.f32 %v1097, %v1100
    %vm1102 = vweird.f32 %v1095
    %vm1103 = vweird.f32 %v1097
    %vm1104 = vmor %vm1102, %vm1103
    %v1105 = vsel %vm1104, %v1097, %v1101
    %v1106 = vand.u32 2147483647, %v1095
    %vm1107 = vcmp.eq.f32.partialorder %v1106, 8.507059e+37
    %v1108 = vand.u32 %v1095, 2147483648
    %v1109 = vor.u32 1.1754944e-38, %v1108
    %v1110 = vsel %vm1107, %v1109, %v1105
    %v1111 = vmul.f32 1.0, %v1110
    %v1112 = vrcp.pop %v1096
    %v1113 = vmul.f32 %v1096, %v1112
    %v1114 = vsub.f32 1.0, %v1113
    %v1115 = vmul.f32 %v1112, %v1114
    %v1116 = vadd.f32 %v1112, %v1115
    %vm1117 = vweird.f32 %v1096
    %vm1118 = vweird.f32 %v1112
    %vm1119 = vmor %vm1117, %vm1118
    %v1120 = vsel %vm1119, %v1112, %v1116
    %v1121 = vand.u32 2147483647, %v1096
    %vm1122 = vcmp.eq.f32.partialorder %v1121, 8.507059e+37
    %v1123 = vand.u32 %v1096, 2147483648
    %v1124 = vor.u32 1.1754944e-38, %v1123
    %v1125 = vsel %vm1122, %v1124, %v1120
    %v1126 = vmul.f32 1.0, %v1125
    %v1129 = vrot.slane %v1126, 7
    %vm1130 = vcmask 1040384
    %v1131 = vsel %vm1130, %v1111, %v1129
    %v1132 = vsel %vm152, %v1111, %v1129
    %v1133 = vrot.slane %v1132, 1
    %v1134 = vperm.slane %v1131, 0
    %v1135 = vperm.slane %v1131, 1
    %v1136 = vperm.slane %v1133, 0
    %v1137 = vperm.slane %v1133, 1
    %1142 = vst [vmem:[#allocation1] ss:$2 sm:$0xff] %v60
    %v1143 = vld.sshfl [vmem:[#allocation1] sm:$0xff pattern:$0x75316420]
    %v1144 = vld.sshfl [vmem:[#allocation1 + $0x8] sm:$0xff pattern:$0x75316420]
    %s1145 = scalar_lea.vmem [#allocation1], 16
    %1146 = vst [vmem:[%s1145] ss:$2 sm:$0xff] %v61
    %v1147 = vld.sshfl [vmem:[#allocation1 + $0x10] sm:$0xff pattern:$0x75316420]
    %v1148 = vld.sshfl [vmem:[#allocation1 + $0x18] sm:$0xff pattern:$0x75316420]
    %v1153 = vmul.f32 %v1134, %v1143
    %v1154 = vmul.f32 %v1135, %v1144
    %v1155 = vmul.f32 %v1136, %v1147
    %v1156 = vmul.f32 %v1137, %v1148
    %v1161 = vrot.slane %v1154, 4
    %v1162 = vrot.slane %v1156, 4
    %v1163 = vsel %vm75, %v1153, %v1161
    %v1164 = vsel %vm75, %v1155, %v1162
    %1167 = vst [vmem:[#allocation9] sm:$0xff] %v1163
    %1168 = vst [vmem:[#allocation9 + $0x8] sm:$0xff] %v1164
    // Predicated region
    $region26: #{tpu_custom_call.1} parent=1 // pred_check
      _
    $region27: #{tpu_custom_call.1} parent=1 // pred_check_branch
      %1170 = sbr.rel (0) target = $region29
    $region28: #{tpu_custom_call.1} parent=1 // pred_region
      %1172 = vsyncadd [#allocation4], 0
      %s1173 = sshll.u32 [#allocation9], 4
      %s1174 = int_to_ptr.vmem [resolvable:$true] %s1173
      %s1175 = sshll.u32 %s3, 4
      %s1176 = int_to_ptr.hbm [resolvable:$true] %s1175
      %1181 = dma.vmem_to_hbm [thread:$0]  %s1174, 256, %s1176, [#allocation4], 128, 128, 8
    $region29: #{tpu_custom_call.1} parent=1 // pred_fallthru
      _
    // Predicated region
    $region30: #{tpu_custom_call.1} parent=1 // pred_check
      _
    $region31: #{tpu_custom_call.1} parent=1 // pred_check_branch
      %1183 = sbr.rel (0) target = $region33
    $region32: #{tpu_custom_call.1} parent=1 // pred_region
      %1185 = dma.done [#allocation4], 256
    $region33: #{tpu_custom_call.1} parent=1 // pred_fallthru
      _
    %1186 = vsyncpa [#allocation3], 1
    %1187 = vsyncpa [#allocation8], 1
    %1188 = vsyncpa [#allocation4], 1
    %1189 = vsyncpa [#allocation5], 1

</llo_original>
